<compile_context>
chip_gen: v7x
topology: tpu7x:2x2x1
jax: 0.10.0
libtpu: 0.0.40
codegen_flags: <defaults>
</compile_context>

<pallas_src>
import math

import jax
import jax.numpy as jnp
from jax.experimental import pallas as pl
from jax.experimental.pallas import tpu as pltpu  # noqa: F401  (kept for CompilerParams if needed)

# ---- problem sizes (small, consistent with the module) ----
BATCH = 2
SEQ = 8
HIDDEN = 32
NUM_HEADS = 4
HEAD_DIM = HIDDEN // NUM_HEADS
LORA_R = 8
PRUNE_RATIO = 0.5

_PACK = 5 * HIDDEN + NUM_HEADS * SEQ  # 192 lanes: q|k|v|o|o_final|a


def _attn_kernel(x_ref, wqkv_ref, bqkv_ref, wo_ref, bo_ref, mask_ref, packed_ref):
    """Whole-batch fused attention forward (single grid step).

    Inputs  : x (B,S,H), Wqkv (H,3H), bqkv (1,3H), Wo (H,H), bo (1,H),
              mask (B*NH,S,S) additive.
    Output  : packed (B,S,5H+NH*S) = [q | k | v | o | o_final | a].
    """
    x2d = x_ref[...].reshape(BATCH * SEQ, HIDDEN)  # (BS, H)

    # Fused QKV projection (LoRA already folded into Wqkv on the host).
    qkv = jnp.dot(x2d, wqkv_ref[...], preferred_element_type=jnp.float32) + bqkv_ref[0]

    def to_heads(t):  # (BS, H) -> (B*NH, S, HD)
        t = t.reshape(BATCH, SEQ, NUM_HEADS, HEAD_DIM)
        return t.transpose(0, 2, 1, 3).reshape(BATCH * NUM_HEADS, SEQ, HEAD_DIM)

    qh = to_heads(qkv[:, 0 * HIDDEN:1 * HIDDEN])
    kh = to_heads(qkv[:, 1 * HIDDEN:2 * HIDDEN])
    vh = to_heads(qkv[:, 2 * HIDDEN:3 * HIDDEN])

    scale = 1.0 / math.sqrt(HEAD_DIM)

    # Batched (over B*NH) scaled dot-product attention with stable softmax.
    s = jnp.einsum("nqd,nkd->nqk", qh, kh,
                   preferred_element_type=jnp.float32)            # (B*NH, S, S)
    s = s * scale + mask_ref[...]
    s = s - jnp.max(s, axis=-1, keepdims=True)
    e = jnp.exp(s)
    a = e * pl.reciprocal(jnp.sum(e, axis=-1, keepdims=True), approx=False)

    oh = jnp.einsum("nqk,nkd->nqd", a, vh,
                    preferred_element_type=jnp.float32)            # (B*NH, S, HD)
    o2d = (oh.reshape(BATCH, NUM_HEADS, SEQ, HEAD_DIM)
             .transpose(0, 2, 1, 3)
             .reshape(BATCH * SEQ, HIDDEN))                        # (BS, H)

    # Output projection (LoRA folded into Wo on the host).
    o_final = jnp.dot(o2d, wo_ref[...], preferred_element_type=jnp.float32) + bo_ref[0]

    # Attention probs packed alongside (only consumed for the kth-value stat).
    a_pack = (a.reshape(BATCH, NUM_HEADS, SEQ, SEQ)
                .transpose(0, 2, 1, 3)
                .reshape(BATCH * SEQ, NUM_HEADS * SEQ))            # (BS, NH*S)

    packed = jnp.concatenate([qkv, o2d, o_final, a_pack], axis=-1)  # (BS, 192)
    packed_ref[...] = packed.reshape(BATCH, SEQ, _PACK)


def mixed_sparse_full_attention(x, params, attention_mask, prune_ratio=PRUNE_RATIO):
    """Returns (o_final, new_static_value, intermediates).

    The first two elements mirror the torch autograd function's forward; the
    third is used only for correctness checks in this script.
    """
    B, S, H = x.shape
    NH = NUM_HEADS
    (wq, bq, wqa, wqb,
     wk, bk, wka, wkb,
     wv, bv, wva, wvb,
     wo, bo, woa, wob) = params

    # ---- one-time host-side weight prep (amortized over the whole call) ----
    wq_eff = wq + wqa @ wqb
    wk_eff = wk + wka @ wkb
    wv_eff = wv + wva @ wvb
    wo_eff = wo + woa @ wob
    wqkv = jnp.concatenate([wq_eff, wk_eff, wv_eff], axis=1)        # (H, 3H)
    bqkv = jnp.concatenate([bq, bk, bv]).reshape(1, 3 * H)          # (1, 3H)
    bo2 = bo.reshape(1, H)
    mask = jnp.broadcast_to(attention_mask, (B, NH, S, S)).reshape(B * NH, S, S)

    def full(shape):
        return pl.BlockSpec(shape, lambda i: tuple(0 for _ in shape))

    packed = pl.pallas_call(
        _attn_kernel,
        out_shape=jax.ShapeDtypeStruct((B, S, _PACK), jnp.float32),
        grid=(1,),
        in_specs=[
            full((B, S, H)),            # x
            full((H, 3 * H)),           # Wqkv (LoRA folded)
            full((1, 3 * H)),           # bqkv
            full((H, H)),               # Wo (LoRA folded)
            full((1, H)),               # bo
            full((B * NH, S, S)),       # additive mask, expanded over heads
        ],
        out_specs=full((B, S, _PACK)),
    )(x, wqkv, bqkv, wo_eff, bo2, mask)

    q = packed[..., 0 * H:1 * H]
    k = packed[..., 1 * H:2 * H]
    v = packed[..., 2 * H:3 * H]
    o = packed[..., 3 * H:4 * H]
    o_final = packed[..., 4 * H:5 * H]
    a = (packed[..., 5 * H:5 * H + NH * S]
         .reshape(B, S, NH, S).transpose(0, 2, 1, 3))               # (B, NH, S, S)

    # --- new_static_value: kth smallest values (plain JAX glue) ---
    # TODO(synk): torch.kthvalue is a global selection; no Pallas TPU sort
    # primitive, so this is done via jnp.sort outside the kernel.
    def kth(t, use_abs=True):
        flat = jnp.abs(t).reshape(-1) if use_abs else t.reshape(-1)
        kidx = max(int(flat.size * prune_ratio), 1)
        return jnp.sort(flat)[kidx - 1]

    new_static_value = (kth(x), kth(q), kth(k), kth(v), kth(a, use_abs=False), kth(o))
    intermediates = (q, k, v, a, o)
    return o_final, new_static_value, intermediates


_mixed_sparse_full_attention_jit = jax.jit(
    mixed_sparse_full_attention, static_argnames=("prune_ratio",))


def _reference(x, params, attention_mask):
    """Pure-JAX reference of the torch forward (unfused, for correctness)."""
    (wq, bq, wqa, wqb, wk, bk, wka, wkb,
     wv, bv, wva, wvb, wo, bo, woa, wob) = params
    B, S, H = x.shape

    def proj(w, b, wa, wb):
        return x @ w + b + (x @ wa) @ wb

    q = proj(wq, bq, wqa, wqb)
    k = proj(wk, bk, wka, wkb)
    v = proj(wv, bv, wva, wvb)

    def to_heads(t):
        return t.reshape(B, S, NUM_HEADS, HEAD_DIM).transpose(0, 2, 1, 3)

    qh, kh, vh = to_heads(q), to_heads(k), to_heads(v)
    s = jnp.einsum("bhqd,bhkd->bhqk", qh, kh) / math.sqrt(HEAD_DIM)
    s = s + attention_mask
    a = jax.nn.softmax(s, axis=-1)
    oh = jnp.einsum("bhqk,bhkd->bhqd", a, vh)
    o = oh.transpose(0, 2, 1, 3).reshape(B, S, H)
    o_final = o @ wo + bo + (o @ woa) @ wob
    return o_final, q, k, v, a, o


if __name__ == "__main__":
    key = jax.random.PRNGKey(0)
    keys = jax.random.split(key, 20)

    def w(kk, shape, scale=0.1):
        return (scale * jax.random.normal(kk, shape)).astype(jnp.float32)

    params = (
        w(keys[0], (HIDDEN, HIDDEN)), w(keys[1], (HIDDEN,)),
        w(keys[2], (HIDDEN, LORA_R)), w(keys[3], (LORA_R, HIDDEN)),
        w(keys[4], (HIDDEN, HIDDEN)), w(keys[5], (HIDDEN,)),
        w(keys[6], (HIDDEN, LORA_R)), w(keys[7], (LORA_R, HIDDEN)),
        w(keys[8], (HIDDEN, HIDDEN)), w(keys[9], (HIDDEN,)),
        w(keys[10], (HIDDEN, LORA_R)), w(keys[11], (LORA_R, HIDDEN)),
        w(keys[12], (HIDDEN, HIDDEN)), w(keys[13], (HIDDEN,)),
        w(keys[14], (HIDDEN, LORA_R)), w(keys[15], (LORA_R, HIDDEN)),
    )

    x = w(keys[16], (BATCH, SEQ, HIDDEN), scale=1.0)

    # additive causal attention mask, shape (B, 1, S, S)
    causal = jnp.tril(jnp.ones((SEQ, SEQ), dtype=jnp.float32))
    attention_mask = jnp.where(causal == 1.0, 0.0, -1e9)[None, None, :, :]
    attention_mask = jnp.broadcast_to(attention_mask, (BATCH, 1, SEQ, SEQ))

    o_final, static_value, (q, k, v, a, o) = _mixed_sparse_full_attention_jit(
        x, params, attention_mask)
    o_final = jax.block_until_ready(o_final)
    static_value = jax.block_until_ready(static_value)

    ref_o_final, ref_q, ref_k, ref_v, ref_a, ref_o = _reference(x, params, attention_mask)
    assert jnp.allclose(o_final, ref_o_final, atol=1e-4, rtol=1e-4), "o_final mismatch"
    assert jnp.allclose(q, ref_q, atol=1e-4, rtol=1e-4), "q mismatch"
    assert jnp.allclose(k, ref_k, atol=1e-4, rtol=1e-4), "k mismatch"
    assert jnp.allclose(v, ref_v, atol=1e-4, rtol=1e-4), "v mismatch"
    assert jnp.allclose(a, ref_a, atol=1e-4, rtol=1e-4), "a mismatch"
    assert jnp.allclose(o, ref_o, atol=1e-4, rtol=1e-4), "o mismatch"
    assert jnp.isfinite(jnp.stack(static_value)).all(), "static_value not finite"

    print("KERNEL_OK")
</pallas_src>

<mosaic_0001>
module attributes {stable_mosaic.version = 11 : i64} {
  func.func @_attn_kernel(%arg0: i32, %arg1: memref<2x8x32xf32, #tpu.memory_space<vmem>>, %arg2: memref<32x96xf32, #tpu.memory_space<vmem>>, %arg3: memref<1x96xf32, #tpu.memory_space<vmem>>, %arg4: memref<32x32xf32, #tpu.memory_space<vmem>>, %arg5: memref<1x32xf32, #tpu.memory_space<vmem>>, %arg6: memref<8x8x8xf32, #tpu.memory_space<vmem>>, %arg7: memref<2x8x192xf32, #tpu.memory_space<vmem>>) attributes {dimension_semantics = [#tpu.dimension_semantics<arbitrary>], iteration_bounds = array<i64: 1>, scalar_prefetch = 0 : i64, scratch_operands = 0 : i64, tpu.core_type = #tpu.core_type<tc>, window_params = [{pipeline_mode = #tpu.pipeline_mode<synchronous>, transform_indices = @transform_0, window_bounds = array<i64: 2, 8, 32>}, {pipeline_mode = #tpu.pipeline_mode<synchronous>, transform_indices = @transform_1, window_bounds = array<i64: 32, 96>}, {pipeline_mode = #tpu.pipeline_mode<synchronous>, transform_indices = @transform_2, window_bounds = array<i64: 1, 96>}, {pipeline_mode = #tpu.pipeline_mode<synchronous>, transform_indices = @transform_3, window_bounds = array<i64: 32, 32>}, {pipeline_mode = #tpu.pipeline_mode<synchronous>, transform_indices = @transform_4, window_bounds = array<i64: 1, 32>}, {pipeline_mode = #tpu.pipeline_mode<synchronous>, transform_indices = @transform_5, window_bounds = array<i64: 8, 8, 8>}, {pipeline_mode = #tpu.pipeline_mode<synchronous>, transform_indices = @transform_6, window_bounds = array<i64: 2, 8, 192>}]} {
    %c0 = arith.constant 0 : index
    %c0_0 = arith.constant 0 : index
    %c0_1 = arith.constant 0 : index
    %0 = vector.load %arg1[%c0, %c0_0, %c0_1] : memref<2x8x32xf32, #tpu.memory_space<vmem>>, vector<2x8x32xf32>
    %1 = vector.shape_cast %0 : vector<2x8x32xf32> to vector<16x32xf32>
    %c0_2 = arith.constant 0 : index
    %c0_3 = arith.constant 0 : index
    %2 = vector.load %arg2[%c0_2, %c0_3] : memref<32x96xf32, #tpu.memory_space<vmem>>, vector<32x96xf32>
    %cst = arith.constant dense<0.000000e+00> : vector<16x96xf32>
    %3 = tpu.matmul %1, %2, %cst {dimension_numbers = #tpu.dot_dimension_numbers<[1], [0], [0], [1], [0, 0, 1, 1], [], []>} : vector<16x32xf32>, vector<32x96xf32>, vector<16x96xf32> -> vector<16x96xf32>
    %c0_4 = arith.constant 0 : index
    %c0_5 = arith.constant 0 : index
    %4 = vector.load %arg3[%c0_4, %c0_5] : memref<1x96xf32, #tpu.memory_space<vmem>>, vector<1x96xf32>
    %5 = vector.shape_cast %4 : vector<1x96xf32> to vector<96xf32>
    %6 = vector.shape_cast %5 : vector<96xf32> to vector<1x96xf32>
    %7 = vector.broadcast %6 : vector<1x96xf32> to vector<16x96xf32>
    %8 = arith.addf %3, %7 : vector<16x96xf32>
    %9 = vector.extract_strided_slice %8 {offsets = [0, 0], sizes = [16, 32], strides = [1, 1]} : vector<16x96xf32> to vector<16x32xf32>
    %10 = vector.shape_cast %9 : vector<16x32xf32> to vector<2x8x4x8xf32>
    %11 = tpu.transpose %10, [0, 2, 1, 3] : vector<2x8x4x8xf32> -> vector<2x4x8x8xf32>
    %12 = vector.shape_cast %11 : vector<2x4x8x8xf32> to vector<8x8x8xf32>
    %13 = vector.extract_strided_slice %8 {offsets = [0, 32], sizes = [16, 32], strides = [1, 1]} : vector<16x96xf32> to vector<16x32xf32>
    %14 = vector.shape_cast %13 : vector<16x32xf32> to vector<2x8x4x8xf32>
    %15 = tpu.transpose %14, [0, 2, 1, 3] : vector<2x8x4x8xf32> -> vector<2x4x8x8xf32>
    %16 = vector.shape_cast %15 : vector<2x4x8x8xf32> to vector<8x8x8xf32>
    %17 = vector.extract_strided_slice %8 {offsets = [0, 64], sizes = [16, 32], strides = [1, 1]} : vector<16x96xf32> to vector<16x32xf32>
    %18 = vector.shape_cast %17 : vector<16x32xf32> to vector<2x8x4x8xf32>
    %19 = tpu.transpose %18, [0, 2, 1, 3] : vector<2x8x4x8xf32> -> vector<2x4x8x8xf32>
    %20 = vector.shape_cast %19 : vector<2x4x8x8xf32> to vector<8x8x8xf32>
    "tpu.trace_start"() <{level = 10 : i32, message = "nqd,nkd->nqk"}> : () -> ()
    %cst_6 = arith.constant dense<0.000000e+00> : vector<8x8x8xf32>
    %21 = tpu.matmul %12, %16, %cst_6 {dimension_numbers = #tpu.dot_dimension_numbers<[2], [2], [1], [1], [0, 0, 0, 1, 1, 1], [0], [0]>} : vector<8x8x8xf32>, vector<8x8x8xf32>, vector<8x8x8xf32> -> vector<8x8x8xf32>
    "tpu.trace_stop"() : () -> ()
    %cst_7 = arith.constant 0.353553385 : f32
    %22 = vector.broadcast %cst_7 : f32 to vector<8x8x8xf32>
    %23 = arith.mulf %21, %22 : vector<8x8x8xf32>
    %c0_8 = arith.constant 0 : index
    %c0_9 = arith.constant 0 : index
    %c0_10 = arith.constant 0 : index
    %24 = vector.load %arg6[%c0_8, %c0_9, %c0_10] : memref<8x8x8xf32, #tpu.memory_space<vmem>>, vector<8x8x8xf32>
    %25 = arith.addf %23, %24 : vector<8x8x8xf32>
    %cst_11 = arith.constant dense<0xFF800000> : vector<8x8xf32>
    %26 = vector.multi_reduction <maximumf>, %25, %cst_11 [2] : vector<8x8x8xf32> to vector<8x8xf32>
    %27 = vector.shape_cast %26 : vector<8x8xf32> to vector<8x8x1xf32>
    %28 = vector.broadcast %27 : vector<8x8x1xf32> to vector<8x8x8xf32>
    %29 = arith.subf %25, %28 : vector<8x8x8xf32>
    %30 = math.exp %29 : vector<8x8x8xf32>
    %cst_12 = arith.constant dense<0.000000e+00> : vector<8x8xf32>
    %31 = vector.multi_reduction <add>, %30, %cst_12 [2] : vector<8x8x8xf32> to vector<8x8xf32>
    %32 = vector.shape_cast %31 : vector<8x8xf32> to vector<8x8x1xf32>
    %33 = tpu.reciprocal %32 : vector<8x8x1xf32> -> vector<8x8x1xf32>
    %34 = vector.broadcast %33 : vector<8x8x1xf32> to vector<8x8x8xf32>
    %35 = arith.mulf %30, %34 : vector<8x8x8xf32>
    "tpu.trace_start"() <{level = 10 : i32, message = "nqk,nkd->nqd"}> : () -> ()
    %cst_13 = arith.constant dense<0.000000e+00> : vector<8x8x8xf32>
    %36 = tpu.matmul %35, %20, %cst_13 {dimension_numbers = #tpu.dot_dimension_numbers<[2], [1], [1], [2], [0, 0, 0, 1, 1, 2], [0], [0]>} : vector<8x8x8xf32>, vector<8x8x8xf32>, vector<8x8x8xf32> -> vector<8x8x8xf32>
    "tpu.trace_stop"() : () -> ()
    %37 = vector.shape_cast %36 : vector<8x8x8xf32> to vector<2x4x8x8xf32>
    %38 = tpu.transpose %37, [0, 2, 1, 3] : vector<2x4x8x8xf32> -> vector<2x8x4x8xf32>
    %39 = vector.shape_cast %38 : vector<2x8x4x8xf32> to vector<16x32xf32>
    %c0_14 = arith.constant 0 : index
    %c0_15 = arith.constant 0 : index
    %40 = vector.load %arg4[%c0_14, %c0_15] : memref<32x32xf32, #tpu.memory_space<vmem>>, vector<32x32xf32>
    %cst_16 = arith.constant dense<0.000000e+00> : vector<16x32xf32>
    %41 = tpu.matmul %39, %40, %cst_16 {dimension_numbers = #tpu.dot_dimension_numbers<[1], [0], [0], [1], [0, 0, 1, 1], [], []>} : vector<16x32xf32>, vector<32x32xf32>, vector<16x32xf32> -> vector<16x32xf32>
    %c0_17 = arith.constant 0 : index
    %c0_18 = arith.constant 0 : index
    %42 = vector.load %arg5[%c0_17, %c0_18] : memref<1x32xf32, #tpu.memory_space<vmem>>, vector<1x32xf32>
    %43 = vector.shape_cast %42 : vector<1x32xf32> to vector<32xf32>
    %44 = vector.shape_cast %43 : vector<32xf32> to vector<1x32xf32>
    %45 = vector.broadcast %44 : vector<1x32xf32> to vector<16x32xf32>
    %46 = arith.addf %41, %45 : vector<16x32xf32>
    %47 = vector.shape_cast %35 : vector<8x8x8xf32> to vector<2x4x8x8xf32>
    %48 = tpu.transpose %47, [0, 2, 1, 3] : vector<2x4x8x8xf32> -> vector<2x8x4x8xf32>
    %49 = vector.shape_cast %48 : vector<2x8x4x8xf32> to vector<16x32xf32>
    %50 = tpu.concatenate %8, %39, %46, %49 in 1 : vector<16x96xf32>, vector<16x32xf32>, vector<16x32xf32>, vector<16x32xf32> -> vector<16x192xf32>
    %51 = vector.shape_cast %50 : vector<16x192xf32> to vector<2x8x192xf32>
    %c0_19 = arith.constant 0 : index
    %c0_20 = arith.constant 0 : index
    %c0_21 = arith.constant 0 : index
    %52 = vector.load %arg7[%c0_19, %c0_20, %c0_21] : memref<2x8x192xf32, #tpu.memory_space<vmem>>, vector<2x8x192xf32>
    tpu.vector_store %arg7[%c0_19, %c0_20, %c0_21], %51 {strides = array<i32>} : memref<2x8x192xf32, #tpu.memory_space<vmem>>, vector<2x8x192xf32>,
    return
  }
  func.func @transform_0(%arg0: i32) -> (i32, i32, i32) {
    %c0_i32 = arith.constant 0 : i32
    %c0_i32_0 = arith.constant 0 : i32
    %c0_i32_1 = arith.constant 0 : i32
    %c0_i32_2 = arith.constant 0 : i32
    return %c0_i32, %c0_i32_0, %c0_i32_1 : i32, i32, i32
  }
  func.func @transform_1(%arg0: i32) -> (i32, i32) {
    %c0_i32 = arith.constant 0 : i32
    %c0_i32_0 = arith.constant 0 : i32
    %c0_i32_1 = arith.constant 0 : i32
    return %c0_i32, %c0_i32_0 : i32, i32
  }
  func.func @transform_2(%arg0: i32) -> (i32, i32) {
    %c0_i32 = arith.constant 0 : i32
    %c0_i32_0 = arith.constant 0 : i32
    %c0_i32_1 = arith.constant 0 : i32
    return %c0_i32, %c0_i32_0 : i32, i32
  }
  func.func @transform_3(%arg0: i32) -> (i32, i32) {
    %c0_i32 = arith.constant 0 : i32
    %c0_i32_0 = arith.constant 0 : i32
    %c0_i32_1 = arith.constant 0 : i32
    return %c0_i32, %c0_i32_0 : i32, i32
  }
  func.func @transform_4(%arg0: i32) -> (i32, i32) {
    %c0_i32 = arith.constant 0 : i32
    %c0_i32_0 = arith.constant 0 : i32
    %c0_i32_1 = arith.constant 0 : i32
    return %c0_i32, %c0_i32_0 : i32, i32
  }
  func.func @transform_5(%arg0: i32) -> (i32, i32, i32) {
    %c0_i32 = arith.constant 0 : i32
    %c0_i32_0 = arith.constant 0 : i32
    %c0_i32_1 = arith.constant 0 : i32
    %c0_i32_2 = arith.constant 0 : i32
    return %c0_i32, %c0_i32_0, %c0_i32_1 : i32, i32, i32
  }
  func.func @transform_6(%arg0: i32) -> (i32, i32, i32) {
    %c0_i32 = arith.constant 0 : i32
    %c0_i32_0 = arith.constant 0 : i32
    %c0_i32_1 = arith.constant 0 : i32
    %c0_i32_2 = arith.constant 0 : i32
    return %c0_i32, %c0_i32_0, %c0_i32_1 : i32, i32, i32
  }
}

</mosaic_0001>

<llo_original>
// kernel: mixed_sparse_full_attention.1
$region0: #{mixed_sparse_full_attention.1}
  #allocation0 [shape = 'u32[]', space=smem, size = 0x4, offset = 0x4, fixed_abs, tag = 'smem constant byte address 0x4 - core index']
  #allocation1 [shape = 'u32[144,128]{1,0:T(1,128)}', space=vmem, size = 0x12000, scoped, tag = 'internal scratch']
  %s0 = inlined_call_operand.vmem [shape: f32[2,8,32], index: 0, kind: input, shape index: {}]
  %s1 = inlined_call_operand.vmem [shape: f32[32,96], index: 1, kind: input, shape index: {}]
  %s2 = inlined_call_operand.vmem [shape: f32[1,96], index: 2, kind: input, shape index: {}]
  %s3 = inlined_call_operand.vmem [shape: f32[32,32], index: 3, kind: input, shape index: {}]
  %s4 = inlined_call_operand.vmem [shape: f32[1,32], index: 4, kind: input, shape index: {}]
  %s5 = inlined_call_operand.vmem [shape: f32[8,8,8], index: 5, kind: input, shape index: {}]
  %s6 = inlined_call_operand.vmem [shape: f32[2,8,192], index: 6, kind: output, shape index: {}]
  %s7 = sld [smem:[#allocation0]]
  $region34: #{mixed_sparse_full_attention.1} parent=0
    _
  %s9 = ssub.s32 1, %s7
  %s10 = scalar_select 0, %s9, %s7
  // Predicated region
  $region2: #{mixed_sparse_full_attention.1} parent=0 // pred_check
    _
  $region3: #{mixed_sparse_full_attention.1} parent=0 // pred_check_branch
    %12 = sbr.rel (0) target = $region5
  $region4: #{mixed_sparse_full_attention.1} parent=0 // pred_region
    _
  $region5: #{mixed_sparse_full_attention.1} parent=0 // pred_fallthru
    _
  // Predicated region
  $region6: #{mixed_sparse_full_attention.1} parent=0 // pred_check
    _
  $region7: #{mixed_sparse_full_attention.1} parent=0 // pred_check_branch
    %14 = sbr.rel (0) target = $region9
  $region8: #{mixed_sparse_full_attention.1} parent=0 // pred_region
    _
  $region9: #{mixed_sparse_full_attention.1} parent=0 // pred_fallthru
    _
  // Predicated region
  $region10: #{mixed_sparse_full_attention.1} parent=0 // pred_check
    _
  $region11: #{mixed_sparse_full_attention.1} parent=0 // pred_check_branch
    %16 = sbr.rel (0) target = $region13
  $region12: #{mixed_sparse_full_attention.1} parent=0 // pred_region
    _
  $region13: #{mixed_sparse_full_attention.1} parent=0 // pred_fallthru
    _
  // Predicated region
  $region14: #{mixed_sparse_full_attention.1} parent=0 // pred_check
    _
  $region15: #{mixed_sparse_full_attention.1} parent=0 // pred_check_branch
    %18 = sbr.rel (0) target = $region17
  $region16: #{mixed_sparse_full_attention.1} parent=0 // pred_region
    _
  $region17: #{mixed_sparse_full_attention.1} parent=0 // pred_fallthru
    _
  // Predicated region
  $region18: #{mixed_sparse_full_attention.1} parent=0 // pred_check
    _
  $region19: #{mixed_sparse_full_attention.1} parent=0 // pred_check_branch
    %20 = sbr.rel (0) target = $region21
  $region20: #{mixed_sparse_full_attention.1} parent=0 // pred_region
    _
  $region21: #{mixed_sparse_full_attention.1} parent=0 // pred_fallthru
    _
  // Predicated region
  $region22: #{mixed_sparse_full_attention.1} parent=0 // pred_check
    _
  $region23: #{mixed_sparse_full_attention.1} parent=0 // pred_check_branch
    %22 = sbr.rel (0) target = $region25
  $region24: #{mixed_sparse_full_attention.1} parent=0 // pred_region
    _
  $region25: #{mixed_sparse_full_attention.1} parent=0 // pred_fallthru
    _
  %v23 = vld [vmem:[%s0] sm:$0xff]
  %v24 = vld [vmem:[%s0 + $0x8] sm:$0xff]
  %v25 = vld [vmem:[%s1] sm:$0xff]
  %v26 = vld [vmem:[%s1 + $0x8] sm:$0xff]
  %v27 = vld [vmem:[%s1 + $0x10] sm:$0xff]
  %v28 = vld [vmem:[%s1 + $0x18] sm:$0xff]
  %v29 = vld [vmem:[%s2] sm:$0x1]
  %v31 = vlaneseq
  %v32 = vshrl.u32 %v31, 7
  %v33 = vsub.s32 0, %v32
  %v34 = vrot.slane %v29, %v33
  %vm36 = vcmask 261120
  %v38 = vsel %vm36, %v23, 0
  %v41 = vsel %vm36, %v24, 0
  %43 = vmatprep.subr.mxu0 0.0
  %44 = vmatpush1.msra.mxu0 %v25
  %45 = vmatprep.subr.mxu0 0.0
  %46 = vmatpush1.msra.mxu0 %v26
  %47 = vmatprep.subr.mxu0 0.0
  %48 = vmatpush1.msra.mxu0 %v27
  %49 = vmatprep.subr.mxu0 0.0
  %50 = vmatpush1.msra.mxu0 %v28
  %51 = vmatprep.subr.mxu0 0.0
  %52 = vmatpush1.msra.mxu0 0.0
  %53 = vmatprep.subr.mxu0 0.0
  %54 = vmatpush1.msra.mxu0 0.0
  %55 = vmatprep.subr.mxu0 0.0
  %56 = vmatpush1.msra.mxu0 0.0
  %57 = vmatprep.subr.mxu0 0.0
  %58 = vmatpush1.msra.mxu0 0.0
  %59 = vmatprep.subr.mxu0 0.0
  %60 = vmatpush1.msra.mxu0 0.0
  %61 = vmatprep.subr.mxu0 0.0
  %62 = vmatpush1.msra.mxu0 0.0
  %63 = vmatprep.subr.mxu0 0.0
  %64 = vmatpush1.msra.mxu0 0.0
  %65 = vmatprep.subr.mxu0 0.0
  %66 = vmatpush1.msra.mxu0 0.0
  %67 = vmatprep.subr.mxu0 0.0
  %68 = vmatpush1.msra.mxu0 0.0
  %69 = vmatprep.subr.mxu0 0.0
  %70 = vmatpush1.msra.mxu0 0.0
  %71 = vmatprep.subr.mxu0 0.0
  %72 = vmatpush1.msra.mxu0 0.0
  %73 = vmatprep.subr.mxu0 0.0
  %74 = vmatpush1.msra.mxu0 0.0
  %75 = vmatprep.subr.mxu0 0.0
  %76 = vmatpush1.msra.mxu0 0.0
  %77 = vmatprep.subr.mxu0 0.0
  %78 = vmatpush1.msra.mxu0 0.0
  %79 = vmatprep.subr.mxu0 0.0
  %80 = vmatpush1.msra.mxu0 0.0
  %81 = vmatprep.subr.mxu0 0.0
  %82 = vmatpush1.msra.mxu0 0.0
  %83 = vmatprep.subr.mxu0 0.0
  %84 = vmatpush1.msra.mxu0 0.0
  %85 = vmatprep.subr.mxu0 0.0
  %86 = vmatpush1.msra.mxu0 0.0
  %87 = vmatprep.subr.mxu0 0.0
  %88 = vmatpush1.msra.mxu0 0.0
  %89 = vmatprep.subr.mxu0 0.0
  %90 = vmatpush1.msra.mxu0 0.0
  %91 = vmatprep.subr.mxu0 0.0
  %92 = vmatpush1.msra.mxu0 0.0
  %93 = vmatprep.subr.mxu0 0.0
  %94 = vmatpush1.msra.mxu0 0.0
  %95 = vmatprep.subr.mxu0 0.0
  %96 = vmatpush1.msra.mxu0 0.0
  %97 = vmatprep.subr.mxu0 0.0
  %98 = vmatpush1.msra.mxu0 0.0
  %99 = vmatprep.subr.mxu0 0.0
  %100 = vmatpush1.msra.mxu0 0.0
  %101 = vmatprep.subr.mxu0 0.0
  %102 = vmatpush1.msra.mxu0 0.0
  %103 = vmatprep.subr.mxu0 0.0
  %104 = vmatpush1.msra.mxu0 0.0
  %105 = vmatprep.subr.mxu0 0.0
  %106 = vmatpush1.msra.mxu0 0.0
  %107 = vmatprep.mubr.f32.mxu0 0.0
  %108 = vmatmul.mubr.f32.gmra.mrb[0].mxu0 %v38
  %v109 = vpop.f32.mrb[0].mxu0
  %v110 = vadd.f32 %v34, %v109
  %v111 = vpop.f32.mrb[0].mxu0
  %112 = vmatprep.mubr.f32.mxu0 0.0
  %113 = vmatmul.mubr.f32.gmra.mrb[0].mxu0 %v41
  %v114 = vpop.f32.mrb[0].mxu0
  %v115 = vadd.f32 %v34, %v114
  %v116 = vpop.f32.mrb[0].mxu0
  %117 = vdwg.mxu0
  %120 = vrot.lane.b32.xlu0 %v110, 120
  %v121 = vpop.permute.xlu0 %120
  %122 = vrot.lane.b32.xlu0 %v115, 120
  %v123 = vpop.permute.xlu0 %122
  %126 = vrot.lane.b32.xlu0 %v110, 112
  %v127 = vpop.permute.xlu0 %126
  %128 = vrot.lane.b32.xlu0 %v115, 112
  %v129 = vpop.permute.xlu0 %128
  %132 = vrot.lane.b32.xlu0 %v110, 104
  %v133 = vpop.permute.xlu0 %132
  %134 = vrot.lane.b32.xlu0 %v115, 104
  %v135 = vpop.permute.xlu0 %134
  %v138 = vcombine.low %v110, %v127
  %v139 = vcombine.high %v110, %v127
  %v141 = vunpack.c.l.s4 1983009808
  %v142 = vunpack.c.0.s8 %v141
  %v143 = vlaneseq
  %v144 = vshrl.u32 %v143, 7
  %v145 = vsub.s32 %v142, %v144
  %v146 = vrot.slane %v138, %v145
  %v148 = vunpack.c.l.s4 1983009808
  %v149 = vunpack.c.0.s8 %v148
  %v150 = vlaneseq
  %v151 = vshrl.u32 %v150, 7
  %v152 = vsub.s32 %v149, %v151
  %v153 = vrot.slane %v139, %v152
  %v154 = vcombine.low %v121, %v133
  %v155 = vcombine.high %v121, %v133
  %v157 = vunpack.c.l.s4 1983009808
  %v158 = vunpack.c.0.s8 %v157
  %v159 = vlaneseq
  %v160 = vshrl.u32 %v159, 7
  %v161 = vsub.s32 %v158, %v160
  %v162 = vrot.slane %v154, %v161
  %v164 = vunpack.c.l.s4 1983009808
  %v165 = vunpack.c.0.s8 %v164
  %v166 = vlaneseq
  %v167 = vshrl.u32 %v166, 7
  %v168 = vsub.s32 %v165, %v167
  %v169 = vrot.slane %v155, %v168
  %v170 = vcombine.low %v146, %v162
  %v171 = vcombine.high %v146, %v162
  %v173 = vunpack.c.l.s4 1934713408
  %v174 = vunpack.c.0.s8 %v173
  %v175 = vlaneseq
  %v176 = vshrl.u32 %v175, 7
  %v177 = vsub.s32 %v174, %v176
  %v178 = vrot.slane %v170, %v177
  %v180 = vunpack.c.l.s4 1934713408
  %v181 = vunpack.c.0.s8 %v180
  %v182 = vlaneseq
  %v183 = vshrl.u32 %v182, 7
  %v184 = vsub.s32 %v181, %v183
  %v185 = vrot.slane %v171, %v184
  %v186 = vcombine.low %v153, %v169
  %v187 = vcombine.high %v153, %v169
  %v189 = vunpack.c.l.s4 1934713408
  %v190 = vunpack.c.0.s8 %v189
  %v191 = vlaneseq
  %v192 = vshrl.u32 %v191, 7
  %v193 = vsub.s32 %v190, %v192
  %v194 = vrot.slane %v186, %v193
  %v196 = vunpack.c.l.s4 1934713408
  %v197 = vunpack.c.0.s8 %v196
  %v198 = vlaneseq
  %v199 = vshrl.u32 %v198, 7
  %v200 = vsub.s32 %v197, %v199
  %v201 = vrot.slane %v187, %v200
  %v202 = vcombine.high %v178, 0.0
  %v203 = vcombine.high %v185, 0.0
  %v204 = vcombine.high %v194, 0.0
  %v205 = vcombine.high %v201, 0.0
  %v206 = vcombine.low %v115, %v129
  %v207 = vcombine.high %v115, %v129
  %v209 = vunpack.c.l.s4 1983009808
  %v210 = vunpack.c.0.s8 %v209
  %v211 = vlaneseq
  %v212 = vshrl.u32 %v211, 7
  %v213 = vsub.s32 %v210, %v212
  %v214 = vrot.slane %v206, %v213
  %v216 = vunpack.c.l.s4 1983009808
  %v217 = vunpack.c.0.s8 %v216
  %v218 = vlaneseq
  %v219 = vshrl.u32 %v218, 7
  %v220 = vsub.s32 %v217, %v219
  %v221 = vrot.slane %v207, %v220
  %v222 = vcombine.low %v123, %v135
  %v223 = vcombine.high %v123, %v135
  %v225 = vunpack.c.l.s4 1983009808
  %v226 = vunpack.c.0.s8 %v225
  %v227 = vlaneseq
  %v228 = vshrl.u32 %v227, 7
  %v229 = vsub.s32 %v226, %v228
  %v230 = vrot.slane %v222, %v229
  %v232 = vunpack.c.l.s4 1983009808
  %v233 = vunpack.c.0.s8 %v232
  %v234 = vlaneseq
  %v235 = vshrl.u32 %v234, 7
  %v236 = vsub.s32 %v233, %v235
  %v237 = vrot.slane %v223, %v236
  %v238 = vcombine.low %v214, %v230
  %v239 = vcombine.high %v214, %v230
  %v241 = vunpack.c.l.s4 1934713408
  %v242 = vunpack.c.0.s8 %v241
  %v243 = vlaneseq
  %v244 = vshrl.u32 %v243, 7
  %v245 = vsub.s32 %v242, %v244
  %v246 = vrot.slane %v238, %v245
  %v248 = vunpack.c.l.s4 1934713408
  %v249 = vunpack.c.0.s8 %v248
  %v250 = vlaneseq
  %v251 = vshrl.u32 %v250, 7
  %v252 = vsub.s32 %v249, %v251
  %v253 = vrot.slane %v239, %v252
  %v254 = vcombine.low %v221, %v237
  %v255 = vcombine.high %v221, %v237
  %v257 = vunpack.c.l.s4 1934713408
  %v258 = vunpack.c.0.s8 %v257
  %v259 = vlaneseq
  %v260 = vshrl.u32 %v259, 7
  %v261 = vsub.s32 %v258, %v260
  %v262 = vrot.slane %v254, %v261
  %v264 = vunpack.c.l.s4 1934713408
  %v265 = vunpack.c.0.s8 %v264
  %v266 = vlaneseq
  %v267 = vshrl.u32 %v266, 7
  %v268 = vsub.s32 %v265, %v267
  %v269 = vrot.slane %v255, %v268
  %v270 = vcombine.high %v246, 0.0
  %v271 = vcombine.high %v253, 0.0
  %v272 = vcombine.high %v262, 0.0
  %v273 = vcombine.high %v269, 0.0
  %v274 = vcombine.low %v178, %v185
  %v276 = vunpack.c.l.s4 1983009808
  %v277 = vunpack.c.0.s8 %v276
  %v278 = vlaneseq
  %v279 = vshrl.u32 %v278, 7
  %v280 = vsub.s32 %v277, %v279
  %v281 = vrot.slane %v274, %v280
  %v282 = vcombine.low %v202, %v203
  %v284 = vunpack.c.l.s4 1983009808
  %v285 = vunpack.c.0.s8 %v284
  %v286 = vlaneseq
  %v287 = vshrl.u32 %v286, 7
  %v288 = vsub.s32 %v285, %v287
  %v289 = vrot.slane %v282, %v288
  %v290 = vcombine.low %v194, %v201
  %v292 = vunpack.c.l.s4 1983009808
  %v293 = vunpack.c.0.s8 %v292
  %v294 = vlaneseq
  %v295 = vshrl.u32 %v294, 7
  %v296 = vsub.s32 %v293, %v295
  %v297 = vrot.slane %v290, %v296
  %v298 = vcombine.low %v204, %v205
  %v300 = vunpack.c.l.s4 1983009808
  %v301 = vunpack.c.0.s8 %v300
  %v302 = vlaneseq
  %v303 = vshrl.u32 %v302, 7
  %v304 = vsub.s32 %v301, %v303
  %v305 = vrot.slane %v298, %v304
  %v306 = vcombine.low %v281, %v289
  %v307 = vcombine.high %v281, %v289
  %v309 = vunpack.c.l.s4 1934713408
  %v310 = vunpack.c.0.s8 %v309
  %v311 = vlaneseq
  %v312 = vshrl.u32 %v311, 7
  %v313 = vsub.s32 %v310, %v312
  %v314 = vrot.slane %v306, %v313
  %v316 = vunpack.c.l.s4 1934713408
  %v317 = vunpack.c.0.s8 %v316
  %v318 = vlaneseq
  %v319 = vshrl.u32 %v318, 7
  %v320 = vsub.s32 %v317, %v319
  %v321 = vrot.slane %v307, %v320
  %v322 = vcombine.low %v297, %v305
  %v323 = vcombine.high %v297, %v305
  %v325 = vunpack.c.l.s4 1934713408
  %v326 = vunpack.c.0.s8 %v325
  %v327 = vlaneseq
  %v328 = vshrl.u32 %v327, 7
  %v329 = vsub.s32 %v326, %v328
  %v330 = vrot.slane %v322, %v329
  %v332 = vunpack.c.l.s4 1934713408
  %v333 = vunpack.c.0.s8 %v332
  %v334 = vlaneseq
  %v335 = vshrl.u32 %v334, 7
  %v336 = vsub.s32 %v333, %v335
  %v337 = vrot.slane %v323, %v336
  %v338 = vcombine.low %v314, %v330
  %v339 = vcombine.high %v314, %v330
  %v340 = vcombine.low %v321, %v337
  %v341 = vcombine.high %v321, %v337
  %v342 = vcombine.low %v246, %v253
  %v344 = vunpack.c.l.s4 1983009808
  %v345 = vunpack.c.0.s8 %v344
  %v346 = vlaneseq
  %v347 = vshrl.u32 %v346, 7
  %v348 = vsub.s32 %v345, %v347
  %v349 = vrot.slane %v342, %v348
  %v350 = vcombine.low %v270, %v271
  %v352 = vunpack.c.l.s4 1983009808
  %v353 = vunpack.c.0.s8 %v352
  %v354 = vlaneseq
  %v355 = vshrl.u32 %v354, 7
  %v356 = vsub.s32 %v353, %v355
  %v357 = vrot.slane %v350, %v356
  %v358 = vcombine.low %v262, %v269
  %v360 = vunpack.c.l.s4 1983009808
  %v361 = vunpack.c.0.s8 %v360
  %v362 = vlaneseq
  %v363 = vshrl.u32 %v362, 7
  %v364 = vsub.s32 %v361, %v363
  %v365 = vrot.slane %v358, %v364
  %v366 = vcombine.low %v272, %v273
  %v368 = vunpack.c.l.s4 1983009808
  %v369 = vunpack.c.0.s8 %v368
  %v370 = vlaneseq
  %v371 = vshrl.u32 %v370, 7
  %v372 = vsub.s32 %v369, %v371
  %v373 = vrot.slane %v366, %v372
  %v374 = vcombine.low %v349, %v357
  %v375 = vcombine.high %v349, %v357
  %v377 = vunpack.c.l.s4 1934713408
  %v378 = vunpack.c.0.s8 %v377
  %v379 = vlaneseq
  %v380 = vshrl.u32 %v379, 7
  %v381 = vsub.s32 %v378, %v380
  %v382 = vrot.slane %v374, %v381
  %v384 = vunpack.c.l.s4 1934713408
  %v385 = vunpack.c.0.s8 %v384
  %v386 = vlaneseq
  %v387 = vshrl.u32 %v386, 7
  %v388 = vsub.s32 %v385, %v387
  %v389 = vrot.slane %v375, %v388
  %v390 = vcombine.low %v365, %v373
  %v391 = vcombine.high %v365, %v373
  %v393 = vunpack.c.l.s4 1934713408
  %v394 = vunpack.c.0.s8 %v393
  %v395 = vlaneseq
  %v396 = vshrl.u32 %v395, 7
  %v397 = vsub.s32 %v394, %v396
  %v398 = vrot.slane %v390, %v397
  %v400 = vunpack.c.l.s4 1934713408
  %v401 = vunpack.c.0.s8 %v400
  %v402 = vlaneseq
  %v403 = vshrl.u32 %v402, 7
  %v404 = vsub.s32 %v401, %v403
  %v405 = vrot.slane %v391, %v404
  %v406 = vcombine.low %v382, %v398
  %v407 = vcombine.high %v382, %v398
  %v408 = vcombine.low %v389, %v405
  %v409 = vcombine.high %v389, %v405
  %410 = vrot.lane.b32.xlu0 %v110, 96
  %v411 = vpop.permute.xlu0 %410
  %412 = vrot.lane.b32.xlu0 %v115, 96
  %v413 = vpop.permute.xlu0 %412
  %414 = vrot.lane.b32.xlu0 %v121, 96
  %v415 = vpop.permute.xlu0 %414
  %416 = vrot.lane.b32.xlu0 %v123, 96
  %v417 = vpop.permute.xlu0 %416
  %418 = vrot.lane.b32.xlu0 %v127, 96
  %v419 = vpop.permute.xlu0 %418
  %420 = vrot.lane.b32.xlu0 %v129, 96
  %v421 = vpop.permute.xlu0 %420
  %422 = vrot.lane.b32.xlu0 %v133, 96
  %v423 = vpop.permute.xlu0 %422
  %424 = vrot.lane.b32.xlu0 %v135, 96
  %v425 = vpop.permute.xlu0 %424
  %v434 = vcombine.low %v411, %v419
  %v435 = vcombine.high %v411, %v419
  %v437 = vunpack.c.l.s4 1983009808
  %v438 = vunpack.c.0.s8 %v437
  %v439 = vlaneseq
  %v440 = vshrl.u32 %v439, 7
  %v441 = vsub.s32 %v438, %v440
  %v442 = vrot.slane %v434, %v441
  %v444 = vunpack.c.l.s4 1983009808
  %v445 = vunpack.c.0.s8 %v444
  %v446 = vlaneseq
  %v447 = vshrl.u32 %v446, 7
  %v448 = vsub.s32 %v445, %v447
  %v449 = vrot.slane %v435, %v448
  %v450 = vcombine.low %v415, %v423
  %v451 = vcombine.high %v415, %v423
  %v453 = vunpack.c.l.s4 1983009808
  %v454 = vunpack.c.0.s8 %v453
  %v455 = vlaneseq
  %v456 = vshrl.u32 %v455, 7
  %v457 = vsub.s32 %v454, %v456
  %v458 = vrot.slane %v450, %v457
  %v460 = vunpack.c.l.s4 1983009808
  %v461 = vunpack.c.0.s8 %v460
  %v462 = vlaneseq
  %v463 = vshrl.u32 %v462, 7
  %v464 = vsub.s32 %v461, %v463
  %v465 = vrot.slane %v451, %v464
  %v466 = vcombine.low %v442, %v458
  %v467 = vcombine.high %v442, %v458
  %v469 = vunpack.c.l.s4 1934713408
  %v470 = vunpack.c.0.s8 %v469
  %v471 = vlaneseq
  %v472 = vshrl.u32 %v471, 7
  %v473 = vsub.s32 %v470, %v472
  %v474 = vrot.slane %v466, %v473
  %v476 = vunpack.c.l.s4 1934713408
  %v477 = vunpack.c.0.s8 %v476
  %v478 = vlaneseq
  %v479 = vshrl.u32 %v478, 7
  %v480 = vsub.s32 %v477, %v479
  %v481 = vrot.slane %v467, %v480
  %v482 = vcombine.low %v449, %v465
  %v483 = vcombine.high %v449, %v465
  %v485 = vunpack.c.l.s4 1934713408
  %v486 = vunpack.c.0.s8 %v485
  %v487 = vlaneseq
  %v488 = vshrl.u32 %v487, 7
  %v489 = vsub.s32 %v486, %v488
  %v490 = vrot.slane %v482, %v489
  %v492 = vunpack.c.l.s4 1934713408
  %v493 = vunpack.c.0.s8 %v492
  %v494 = vlaneseq
  %v495 = vshrl.u32 %v494, 7
  %v496 = vsub.s32 %v493, %v495
  %v497 = vrot.slane %v483, %v496
  %v498 = vcombine.high %v474, 0.0
  %v499 = vcombine.high %v481, 0.0
  %v500 = vcombine.high %v490, 0.0
  %v501 = vcombine.high %v497, 0.0
  %v502 = vcombine.low %v413, %v421
  %v503 = vcombine.high %v413, %v421
  %v505 = vunpack.c.l.s4 1983009808
  %v506 = vunpack.c.0.s8 %v505
  %v507 = vlaneseq
  %v508 = vshrl.u32 %v507, 7
  %v509 = vsub.s32 %v506, %v508
  %v510 = vrot.slane %v502, %v509
  %v512 = vunpack.c.l.s4 1983009808
  %v513 = vunpack.c.0.s8 %v512
  %v514 = vlaneseq
  %v515 = vshrl.u32 %v514, 7
  %v516 = vsub.s32 %v513, %v515
  %v517 = vrot.slane %v503, %v516
  %v518 = vcombine.low %v417, %v425
  %v519 = vcombine.high %v417, %v425
  %v521 = vunpack.c.l.s4 1983009808
  %v522 = vunpack.c.0.s8 %v521
  %v523 = vlaneseq
  %v524 = vshrl.u32 %v523, 7
  %v525 = vsub.s32 %v522, %v524
  %v526 = vrot.slane %v518, %v525
  %v528 = vunpack.c.l.s4 1983009808
  %v529 = vunpack.c.0.s8 %v528
  %v530 = vlaneseq
  %v531 = vshrl.u32 %v530, 7
  %v532 = vsub.s32 %v529, %v531
  %v533 = vrot.slane %v519, %v532
  %v534 = vcombine.low %v510, %v526
  %v535 = vcombine.high %v510, %v526
  %v537 = vunpack.c.l.s4 1934713408
  %v538 = vunpack.c.0.s8 %v537
  %v539 = vlaneseq
  %v540 = vshrl.u32 %v539, 7
  %v541 = vsub.s32 %v538, %v540
  %v542 = vrot.slane %v534, %v541
  %v544 = vunpack.c.l.s4 1934713408
  %v545 = vunpack.c.0.s8 %v544
  %v546 = vlaneseq
  %v547 = vshrl.u32 %v546, 7
  %v548 = vsub.s32 %v545, %v547
  %v549 = vrot.slane %v535, %v548
  %v550 = vcombine.low %v517, %v533
  %v551 = vcombine.high %v517, %v533
  %v553 = vunpack.c.l.s4 1934713408
  %v554 = vunpack.c.0.s8 %v553
  %v555 = vlaneseq
  %v556 = vshrl.u32 %v555, 7
  %v557 = vsub.s32 %v554, %v556
  %v558 = vrot.slane %v550, %v557
  %v560 = vunpack.c.l.s4 1934713408
  %v561 = vunpack.c.0.s8 %v560
  %v562 = vlaneseq
  %v563 = vshrl.u32 %v562, 7
  %v564 = vsub.s32 %v561, %v563
  %v565 = vrot.slane %v551, %v564
  %v566 = vcombine.high %v542, 0.0
  %v567 = vcombine.high %v549, 0.0
  %v568 = vcombine.high %v558, 0.0
  %v569 = vcombine.high %v565, 0.0
  %v570 = vcombine.low %v474, %v481
  %v572 = vunpack.c.l.s4 1983009808
  %v573 = vunpack.c.0.s8 %v572
  %v574 = vlaneseq
  %v575 = vshrl.u32 %v574, 7
  %v576 = vsub.s32 %v573, %v575
  %v577 = vrot.slane %v570, %v576
  %v578 = vcombine.low %v498, %v499
  %v580 = vunpack.c.l.s4 1983009808
  %v581 = vunpack.c.0.s8 %v580
  %v582 = vlaneseq
  %v583 = vshrl.u32 %v582, 7
  %v584 = vsub.s32 %v581, %v583
  %v585 = vrot.slane %v578, %v584
  %v586 = vcombine.low %v490, %v497
  %v588 = vunpack.c.l.s4 1983009808
  %v589 = vunpack.c.0.s8 %v588
  %v590 = vlaneseq
  %v591 = vshrl.u32 %v590, 7
  %v592 = vsub.s32 %v589, %v591
  %v593 = vrot.slane %v586, %v592
  %v594 = vcombine.low %v500, %v501
  %v596 = vunpack.c.l.s4 1983009808
  %v597 = vunpack.c.0.s8 %v596
  %v598 = vlaneseq
  %v599 = vshrl.u32 %v598, 7
  %v600 = vsub.s32 %v597, %v599
  %v601 = vrot.slane %v594, %v600
  %v602 = vcombine.low %v577, %v585
  %v603 = vcombine.high %v577, %v585
  %v605 = vunpack.c.l.s4 1934713408
  %v606 = vunpack.c.0.s8 %v605
  %v607 = vlaneseq
  %v608 = vshrl.u32 %v607, 7
  %v609 = vsub.s32 %v606, %v608
  %v610 = vrot.slane %v602, %v609
  %v612 = vunpack.c.l.s4 1934713408
  %v613 = vunpack.c.0.s8 %v612
  %v614 = vlaneseq
  %v615 = vshrl.u32 %v614, 7
  %v616 = vsub.s32 %v613, %v615
  %v617 = vrot.slane %v603, %v616
  %v618 = vcombine.low %v593, %v601
  %v619 = vcombine.high %v593, %v601
  %v621 = vunpack.c.l.s4 1934713408
  %v622 = vunpack.c.0.s8 %v621
  %v623 = vlaneseq
  %v624 = vshrl.u32 %v623, 7
  %v625 = vsub.s32 %v622, %v624
  %v626 = vrot.slane %v618, %v625
  %v628 = vunpack.c.l.s4 1934713408
  %v629 = vunpack.c.0.s8 %v628
  %v630 = vlaneseq
  %v631 = vshrl.u32 %v630, 7
  %v632 = vsub.s32 %v629, %v631
  %v633 = vrot.slane %v619, %v632
  %v634 = vcombine.low %v610, %v626
  %v635 = vcombine.high %v610, %v626
  %v636 = vcombine.low %v617, %v633
  %v637 = vcombine.high %v617, %v633
  %v638 = vcombine.low %v542, %v549
  %v640 = vunpack.c.l.s4 1983009808
  %v641 = vunpack.c.0.s8 %v640
  %v642 = vlaneseq
  %v643 = vshrl.u32 %v642, 7
  %v644 = vsub.s32 %v641, %v643
  %v645 = vrot.slane %v638, %v644
  %v646 = vcombine.low %v566, %v567
  %v648 = vunpack.c.l.s4 1983009808
  %v649 = vunpack.c.0.s8 %v648
  %v650 = vlaneseq
  %v651 = vshrl.u32 %v650, 7
  %v652 = vsub.s32 %v649, %v651
  %v653 = vrot.slane %v646, %v652
  %v654 = vcombine.low %v558, %v565
  %v656 = vunpack.c.l.s4 1983009808
  %v657 = vunpack.c.0.s8 %v656
  %v658 = vlaneseq
  %v659 = vshrl.u32 %v658, 7
  %v660 = vsub.s32 %v657, %v659
  %v661 = vrot.slane %v654, %v660
  %v662 = vcombine.low %v568, %v569
  %v664 = vunpack.c.l.s4 1983009808
  %v665 = vunpack.c.0.s8 %v664
  %v666 = vlaneseq
  %v667 = vshrl.u32 %v666, 7
  %v668 = vsub.s32 %v665, %v667
  %v669 = vrot.slane %v662, %v668
  %v670 = vcombine.low %v645, %v653
  %v671 = vcombine.high %v645, %v653
  %v673 = vunpack.c.l.s4 1934713408
  %v674 = vunpack.c.0.s8 %v673
  %v675 = vlaneseq
  %v676 = vshrl.u32 %v675, 7
  %v677 = vsub.s32 %v674, %v676
  %v678 = vrot.slane %v670, %v677
  %v680 = vunpack.c.l.s4 1934713408
  %v681 = vunpack.c.0.s8 %v680
  %v682 = vlaneseq
  %v683 = vshrl.u32 %v682, 7
  %v684 = vsub.s32 %v681, %v683
  %v685 = vrot.slane %v671, %v684
  %v686 = vcombine.low %v661, %v669
  %v687 = vcombine.high %v661, %v669
  %v689 = vunpack.c.l.s4 1934713408
  %v690 = vunpack.c.0.s8 %v689
  %v691 = vlaneseq
  %v692 = vshrl.u32 %v691, 7
  %v693 = vsub.s32 %v690, %v692
  %v694 = vrot.slane %v686, %v693
  %v696 = vunpack.c.l.s4 1934713408
  %v697 = vunpack.c.0.s8 %v696
  %v698 = vlaneseq
  %v699 = vshrl.u32 %v698, 7
  %v700 = vsub.s32 %v697, %v699
  %v701 = vrot.slane %v687, %v700
  %v702 = vcombine.low %v678, %v694
  %v703 = vcombine.high %v678, %v694
  %v704 = vcombine.low %v685, %v701
  %v705 = vcombine.high %v685, %v701
  %706 = vrot.lane.b32.xlu0 %v110, 64
  %v707 = vpop.permute.xlu0 %706
  %708 = vrot.lane.b32.xlu0 %v115, 64
  %v709 = vpop.permute.xlu0 %708
  %710 = vrot.lane.b32.xlu0 %v121, 64
  %v711 = vpop.permute.xlu0 %710
  %712 = vrot.lane.b32.xlu0 %v123, 64
  %v713 = vpop.permute.xlu0 %712
  %714 = vrot.lane.b32.xlu0 %v127, 64
  %v715 = vpop.permute.xlu0 %714
  %716 = vrot.lane.b32.xlu0 %v129, 64
  %v717 = vpop.permute.xlu0 %716
  %718 = vrot.lane.b32.xlu0 %v133, 64
  %v719 = vpop.permute.xlu0 %718
  %720 = vrot.lane.b32.xlu0 %v135, 64
  %v721 = vpop.permute.xlu0 %720
  %v730 = vcombine.low %v707, %v715
  %v731 = vcombine.high %v707, %v715
  %v733 = vunpack.c.l.s4 1983009808
  %v734 = vunpack.c.0.s8 %v733
  %v735 = vlaneseq
  %v736 = vshrl.u32 %v735, 7
  %v737 = vsub.s32 %v734, %v736
  %v738 = vrot.slane %v730, %v737
  %v740 = vunpack.c.l.s4 1983009808
  %v741 = vunpack.c.0.s8 %v740
  %v742 = vlaneseq
  %v743 = vshrl.u32 %v742, 7
  %v744 = vsub.s32 %v741, %v743
  %v745 = vrot.slane %v731, %v744
  %v746 = vcombine.low %v711, %v719
  %v747 = vcombine.high %v711, %v719
  %v749 = vunpack.c.l.s4 1983009808
  %v750 = vunpack.c.0.s8 %v749
  %v751 = vlaneseq
  %v752 = vshrl.u32 %v751, 7
  %v753 = vsub.s32 %v750, %v752
  %v754 = vrot.slane %v746, %v753
  %v756 = vunpack.c.l.s4 1983009808
  %v757 = vunpack.c.0.s8 %v756
  %v758 = vlaneseq
  %v759 = vshrl.u32 %v758, 7
  %v760 = vsub.s32 %v757, %v759
  %v761 = vrot.slane %v747, %v760
  %v762 = vcombine.low %v738, %v754
  %v763 = vcombine.high %v738, %v754
  %v765 = vunpack.c.l.s4 1934713408
  %v766 = vunpack.c.0.s8 %v765
  %v767 = vlaneseq
  %v768 = vshrl.u32 %v767, 7
  %v769 = vsub.s32 %v766, %v768
  %v770 = vrot.slane %v762, %v769
  %v772 = vunpack.c.l.s4 1934713408
  %v773 = vunpack.c.0.s8 %v772
  %v774 = vlaneseq
  %v775 = vshrl.u32 %v774, 7
  %v776 = vsub.s32 %v773, %v775
  %v777 = vrot.slane %v763, %v776
  %v778 = vcombine.low %v745, %v761
  %v779 = vcombine.high %v745, %v761
  %v781 = vunpack.c.l.s4 1934713408
  %v782 = vunpack.c.0.s8 %v781
  %v783 = vlaneseq
  %v784 = vshrl.u32 %v783, 7
  %v785 = vsub.s32 %v782, %v784
  %v786 = vrot.slane %v778, %v785
  %v788 = vunpack.c.l.s4 1934713408
  %v789 = vunpack.c.0.s8 %v788
  %v790 = vlaneseq
  %v791 = vshrl.u32 %v790, 7
  %v792 = vsub.s32 %v789, %v791
  %v793 = vrot.slane %v779, %v792
  %v794 = vcombine.high %v770, 0.0
  %v795 = vcombine.high %v777, 0.0
  %v796 = vcombine.high %v786, 0.0
  %v797 = vcombine.high %v793, 0.0
  %v798 = vcombine.low %v709, %v717
  %v799 = vcombine.high %v709, %v717
  %v801 = vunpack.c.l.s4 1983009808
  %v802 = vunpack.c.0.s8 %v801
  %v803 = vlaneseq
  %v804 = vshrl.u32 %v803, 7
  %v805 = vsub.s32 %v802, %v804
  %v806 = vrot.slane %v798, %v805
  %v808 = vunpack.c.l.s4 1983009808
  %v809 = vunpack.c.0.s8 %v808
  %v810 = vlaneseq
  %v811 = vshrl.u32 %v810, 7
  %v812 = vsub.s32 %v809, %v811
  %v813 = vrot.slane %v799, %v812
  %v814 = vcombine.low %v713, %v721
  %v815 = vcombine.high %v713, %v721
  %v817 = vunpack.c.l.s4 1983009808
  %v818 = vunpack.c.0.s8 %v817
  %v819 = vlaneseq
  %v820 = vshrl.u32 %v819, 7
  %v821 = vsub.s32 %v818, %v820
  %v822 = vrot.slane %v814, %v821
  %v824 = vunpack.c.l.s4 1983009808
  %v825 = vunpack.c.0.s8 %v824
  %v826 = vlaneseq
  %v827 = vshrl.u32 %v826, 7
  %v828 = vsub.s32 %v825, %v827
  %v829 = vrot.slane %v815, %v828
  %v830 = vcombine.low %v806, %v822
  %v831 = vcombine.high %v806, %v822
  %v833 = vunpack.c.l.s4 1934713408
  %v834 = vunpack.c.0.s8 %v833
  %v835 = vlaneseq
  %v836 = vshrl.u32 %v835, 7
  %v837 = vsub.s32 %v834, %v836
  %v838 = vrot.slane %v830, %v837
  %v840 = vunpack.c.l.s4 1934713408
  %v841 = vunpack.c.0.s8 %v840
  %v842 = vlaneseq
  %v843 = vshrl.u32 %v842, 7
  %v844 = vsub.s32 %v841, %v843
  %v845 = vrot.slane %v831, %v844
  %v846 = vcombine.low %v813, %v829
  %v847 = vcombine.high %v813, %v829
  %v849 = vunpack.c.l.s4 1934713408
  %v850 = vunpack.c.0.s8 %v849
  %v851 = vlaneseq
  %v852 = vshrl.u32 %v851, 7
  %v853 = vsub.s32 %v850, %v852
  %v854 = vrot.slane %v846, %v853
  %v856 = vunpack.c.l.s4 1934713408
  %v857 = vunpack.c.0.s8 %v856
  %v858 = vlaneseq
  %v859 = vshrl.u32 %v858, 7
  %v860 = vsub.s32 %v857, %v859
  %v861 = vrot.slane %v847, %v860
  %v862 = vcombine.high %v838, 0.0
  %v863 = vcombine.high %v845, 0.0
  %v864 = vcombine.high %v854, 0.0
  %v865 = vcombine.high %v861, 0.0
  %v866 = vcombine.low %v770, %v777
  %v868 = vunpack.c.l.s4 1983009808
  %v869 = vunpack.c.0.s8 %v868
  %v870 = vlaneseq
  %v871 = vshrl.u32 %v870, 7
  %v872 = vsub.s32 %v869, %v871
  %v873 = vrot.slane %v866, %v872
  %v874 = vcombine.low %v794, %v795
  %v876 = vunpack.c.l.s4 1983009808
  %v877 = vunpack.c.0.s8 %v876
  %v878 = vlaneseq
  %v879 = vshrl.u32 %v878, 7
  %v880 = vsub.s32 %v877, %v879
  %v881 = vrot.slane %v874, %v880
  %v882 = vcombine.low %v786, %v793
  %v884 = vunpack.c.l.s4 1983009808
  %v885 = vunpack.c.0.s8 %v884
  %v886 = vlaneseq
  %v887 = vshrl.u32 %v886, 7
  %v888 = vsub.s32 %v885, %v887
  %v889 = vrot.slane %v882, %v888
  %v890 = vcombine.low %v796, %v797
  %v892 = vunpack.c.l.s4 1983009808
  %v893 = vunpack.c.0.s8 %v892
  %v894 = vlaneseq
  %v895 = vshrl.u32 %v894, 7
  %v896 = vsub.s32 %v893, %v895
  %v897 = vrot.slane %v890, %v896
  %v898 = vcombine.low %v873, %v881
  %v899 = vcombine.high %v873, %v881
  %v901 = vunpack.c.l.s4 1934713408
  %v902 = vunpack.c.0.s8 %v901
  %v903 = vlaneseq
  %v904 = vshrl.u32 %v903, 7
  %v905 = vsub.s32 %v902, %v904
  %v906 = vrot.slane %v898, %v905
  %v908 = vunpack.c.l.s4 1934713408
  %v909 = vunpack.c.0.s8 %v908
  %v910 = vlaneseq
  %v911 = vshrl.u32 %v910, 7
  %v912 = vsub.s32 %v909, %v911
  %v913 = vrot.slane %v899, %v912
  %v914 = vcombine.low %v889, %v897
  %v915 = vcombine.high %v889, %v897
  %v917 = vunpack.c.l.s4 1934713408
  %v918 = vunpack.c.0.s8 %v917
  %v919 = vlaneseq
  %v920 = vshrl.u32 %v919, 7
  %v921 = vsub.s32 %v918, %v920
  %v922 = vrot.slane %v914, %v921
  %v924 = vunpack.c.l.s4 1934713408
  %v925 = vunpack.c.0.s8 %v924
  %v926 = vlaneseq
  %v927 = vshrl.u32 %v926, 7
  %v928 = vsub.s32 %v925, %v927
  %v929 = vrot.slane %v915, %v928
  %v930 = vcombine.low %v906, %v922
  %v931 = vcombine.high %v906, %v922
  %v932 = vcombine.low %v913, %v929
  %v933 = vcombine.high %v913, %v929
  %v934 = vcombine.low %v838, %v845
  %v936 = vunpack.c.l.s4 1983009808
  %v937 = vunpack.c.0.s8 %v936
  %v938 = vlaneseq
  %v939 = vshrl.u32 %v938, 7
  %v940 = vsub.s32 %v937, %v939
  %v941 = vrot.slane %v934, %v940
  %v942 = vcombine.low %v862, %v863
  %v944 = vunpack.c.l.s4 1983009808
  %v945 = vunpack.c.0.s8 %v944
  %v946 = vlaneseq
  %v947 = vshrl.u32 %v946, 7
  %v948 = vsub.s32 %v945, %v947
  %v949 = vrot.slane %v942, %v948
  %v950 = vcombine.low %v854, %v861
  %v952 = vunpack.c.l.s4 1983009808
  %v953 = vunpack.c.0.s8 %v952
  %v954 = vlaneseq
  %v955 = vshrl.u32 %v954, 7
  %v956 = vsub.s32 %v953, %v955
  %v957 = vrot.slane %v950, %v956
  %v958 = vcombine.low %v864, %v865
  %v960 = vunpack.c.l.s4 1983009808
  %v961 = vunpack.c.0.s8 %v960
  %v962 = vlaneseq
  %v963 = vshrl.u32 %v962, 7
  %v964 = vsub.s32 %v961, %v963
  %v965 = vrot.slane %v958, %v964
  %v966 = vcombine.low %v941, %v949
  %v967 = vcombine.high %v941, %v949
  %v969 = vunpack.c.l.s4 1934713408
  %v970 = vunpack.c.0.s8 %v969
  %v971 = vlaneseq
  %v972 = vshrl.u32 %v971, 7
  %v973 = vsub.s32 %v970, %v972
  %v974 = vrot.slane %v966, %v973
  %v976 = vunpack.c.l.s4 1934713408
  %v977 = vunpack.c.0.s8 %v976
  %v978 = vlaneseq
  %v979 = vshrl.u32 %v978, 7
  %v980 = vsub.s32 %v977, %v979
  %v981 = vrot.slane %v967, %v980
  %v982 = vcombine.low %v957, %v965
  %v983 = vcombine.high %v957, %v965
  %v985 = vunpack.c.l.s4 1934713408
  %v986 = vunpack.c.0.s8 %v985
  %v987 = vlaneseq
  %v988 = vshrl.u32 %v987, 7
  %v989 = vsub.s32 %v986, %v988
  %v990 = vrot.slane %v982, %v989
  %v992 = vunpack.c.l.s4 1934713408
  %v993 = vunpack.c.0.s8 %v992
  %v994 = vlaneseq
  %v995 = vshrl.u32 %v994, 7
  %v996 = vsub.s32 %v993, %v995
  %v997 = vrot.slane %v983, %v996
  %v998 = vcombine.low %v974, %v990
  %v999 = vcombine.high %v974, %v990
  %v1000 = vcombine.low %v981, %v997
  %v1001 = vcombine.high %v981, %v997
  %vm1002 = vcmask 64512
  %v1004 = vsel %vm1002, %v338, 0
  %v1007 = vsel %vm1002, %v634, 0
  %1009 = vmatprep.subr.mxu0 0.0
  %1010 = vmatpush1.xpose.msra.mxu0 %v1007
  %1011 = vmatprep.subr.mxu0 0.0
  %1012 = vmatpush1.xpose.msra.mxu0 0.0
  %1013 = vmatprep.subr.mxu0 0.0
  %1014 = vmatpush1.xpose.msra.mxu0 0.0
  %1015 = vmatprep.subr.mxu0 0.0
  %1016 = vmatpush1.xpose.msra.mxu0 0.0
  %1017 = vmatprep.subr.mxu0 0.0
  %1018 = vmatpush1.xpose.msra.mxu0 0.0
  %1019 = vmatprep.subr.mxu0 0.0
  %1020 = vmatpush1.xpose.msra.mxu0 0.0
  %1021 = vmatprep.subr.mxu0 0.0
  %1022 = vmatpush1.xpose.msra.mxu0 0.0
  %1023 = vmatprep.subr.mxu0 0.0
  %1024 = vmatpush1.xpose.msra.mxu0 0.0
  %1025 = vmatprep.subr.mxu0 0.0
  %1026 = vmatpush1.xpose.msra.mxu0 0.0
  %1027 = vmatprep.subr.mxu0 0.0
  %1028 = vmatpush1.xpose.msra.mxu0 0.0
  %1029 = vmatprep.subr.mxu0 0.0
  %1030 = vmatpush1.xpose.msra.mxu0 0.0
  %1031 = vmatprep.subr.mxu0 0.0
  %1032 = vmatpush1.xpose.msra.mxu0 0.0
  %1033 = vmatprep.subr.mxu0 0.0
  %1034 = vmatpush1.xpose.msra.mxu0 0.0
  %1035 = vmatprep.subr.mxu0 0.0
  %1036 = vmatpush1.xpose.msra.mxu0 0.0
  %1037 = vmatprep.subr.mxu0 0.0
  %1038 = vmatpush1.xpose.msra.mxu0 0.0
  %1039 = vmatprep.subr.mxu0 0.0
  %1040 = vmatpush1.xpose.msra.mxu0 0.0
  %1041 = vmatprep.subr.mxu0 0.0
  %1042 = vmatpush1.xpose.msra.mxu0 0.0
  %1043 = vmatprep.subr.mxu0 0.0
  %1044 = vmatpush1.xpose.msra.mxu0 0.0
  %1045 = vmatprep.subr.mxu0 0.0
  %1046 = vmatpush1.xpose.msra.mxu0 0.0
  %1047 = vmatprep.subr.mxu0 0.0
  %1048 = vmatpush1.xpose.msra.mxu0 0.0
  %1049 = vmatprep.subr.mxu0 0.0
  %1050 = vmatpush1.xpose.msra.mxu0 0.0
  %1051 = vmatprep.subr.mxu0 0.0
  %1052 = vmatpush1.xpose.msra.mxu0 0.0
  %1053 = vmatprep.subr.mxu0 0.0
  %1054 = vmatpush1.xpose.msra.mxu0 0.0
  %1055 = vmatprep.subr.mxu0 0.0
  %1056 = vmatpush1.xpose.msra.mxu0 0.0
  %1057 = vmatprep.subr.mxu0 0.0
  %1058 = vmatpush1.xpose.msra.mxu0 0.0
  %1059 = vmatprep.subr.mxu0 0.0
  %1060 = vmatpush1.xpose.msra.mxu0 0.0
  %1061 = vmatprep.subr.mxu0 0.0
  %1062 = vmatpush1.xpose.msra.mxu0 0.0
  %1063 = vmatprep.subr.mxu0 0.0
  %1064 = vmatpush1.xpose.msra.mxu0 0.0
  %1065 = vmatprep.subr.mxu0 0.0
  %1066 = vmatpush1.xpose.msra.mxu0 0.0
  %1067 = vmatprep.subr.mxu0 0.0
  %1068 = vmatpush1.xpose.msra.mxu0 0.0
  %1069 = vmatprep.subr.mxu0 0.0
  %1070 = vmatpush1.xpose.msra.mxu0 0.0
  %1071 = vmatprep.subr.mxu0 0.0
  %1072 = vmatpush1.xpose.msra.mxu0 0.0
  %1073 = vmatprep.mubr.f32.mxu0 0.0
  %1074 = vmatmul.mubr.f32.gmra.mrb[0].mxu0 %v1004
  %v1075 = vpop.f32.mrb[0].mxu0
  %v1076 = vadd.f32 0.0, %v1075
  %v1077 = vpop.f32.mrb[0].mxu0
  %1078 = vdwg.mxu0
  %v1080 = vsel %vm1002, %v339, 0
  %v1083 = vsel %vm1002, %v635, 0
  %1085 = vmatprep.subr.mxu0 0.0
  %1086 = vmatpush1.xpose.msra.mxu0 %v1083
  %1087 = vmatprep.subr.mxu0 0.0
  %1088 = vmatpush1.xpose.msra.mxu0 0.0
  %1089 = vmatprep.subr.mxu0 0.0
  %1090 = vmatpush1.xpose.msra.mxu0 0.0
  %1091 = vmatprep.subr.mxu0 0.0
  %1092 = vmatpush1.xpose.msra.mxu0 0.0
  %1093 = vmatprep.subr.mxu0 0.0
  %1094 = vmatpush1.xpose.msra.mxu0 0.0
  %1095 = vmatprep.subr.mxu0 0.0
  %1096 = vmatpush1.xpose.msra.mxu0 0.0
  %1097 = vmatprep.subr.mxu0 0.0
  %1098 = vmatpush1.xpose.msra.mxu0 0.0
  %1099 = vmatprep.subr.mxu0 0.0
  %1100 = vmatpush1.xpose.msra.mxu0 0.0
  %1101 = vmatprep.subr.mxu0 0.0
  %1102 = vmatpush1.xpose.msra.mxu0 0.0
  %1103 = vmatprep.subr.mxu0 0.0
  %1104 = vmatpush1.xpose.msra.mxu0 0.0
  %1105 = vmatprep.subr.mxu0 0.0
  %1106 = vmatpush1.xpose.msra.mxu0 0.0
  %1107 = vmatprep.subr.mxu0 0.0
  %1108 = vmatpush1.xpose.msra.mxu0 0.0
  %1109 = vmatprep.subr.mxu0 0.0
  %1110 = vmatpush1.xpose.msra.mxu0 0.0
  %1111 = vmatprep.subr.mxu0 0.0
  %1112 = vmatpush1.xpose.msra.mxu0 0.0
  %1113 = vmatprep.subr.mxu0 0.0
  %1114 = vmatpush1.xpose.msra.mxu0 0.0
  %1115 = vmatprep.subr.mxu0 0.0
  %1116 = vmatpush1.xpose.msra.mxu0 0.0
  %1117 = vmatprep.subr.mxu0 0.0
  %1118 = vmatpush1.xpose.msra.mxu0 0.0
  %1119 = vmatprep.subr.mxu0 0.0
  %1120 = vmatpush1.xpose.msra.mxu0 0.0
  %1121 = vmatprep.subr.mxu0 0.0
  %1122 = vmatpush1.xpose.msra.mxu0 0.0
  %1123 = vmatprep.subr.mxu0 0.0
  %1124 = vmatpush1.xpose.msra.mxu0 0.0
  %1125 = vmatprep.subr.mxu0 0.0
  %1126 = vmatpush1.xpose.msra.mxu0 0.0
  %1127 = vmatprep.subr.mxu0 0.0
  %1128 = vmatpush1.xpose.msra.mxu0 0.0
  %1129 = vmatprep.subr.mxu0 0.0
  %1130 = vmatpush1.xpose.msra.mxu0 0.0
  %1131 = vmatprep.subr.mxu0 0.0
  %1132 = vmatpush1.xpose.msra.mxu0 0.0
  %1133 = vmatprep.subr.mxu0 0.0
  %1134 = vmatpush1.xpose.msra.mxu0 0.0
  %1135 = vmatprep.subr.mxu0 0.0
  %1136 = vmatpush1.xpose.msra.mxu0 0.0
  %1137 = vmatprep.subr.mxu0 0.0
  %1138 = vmatpush1.xpose.msra.mxu0 0.0
  %1139 = vmatprep.subr.mxu0 0.0
  %1140 = vmatpush1.xpose.msra.mxu0 0.0
  %1141 = vmatprep.subr.mxu0 0.0
  %1142 = vmatpush1.xpose.msra.mxu0 0.0
  %1143 = vmatprep.subr.mxu0 0.0
  %1144 = vmatpush1.xpose.msra.mxu0 0.0
  %1145 = vmatprep.subr.mxu0 0.0
  %1146 = vmatpush1.xpose.msra.mxu0 0.0
  %1147 = vmatprep.subr.mxu0 0.0
  %1148 = vmatpush1.xpose.msra.mxu0 0.0
  %1149 = vmatprep.mubr.f32.mxu0 0.0
  %1150 = vmatmul.mubr.f32.gmra.mrb[0].mxu0 %v1080
  %v1151 = vpop.f32.mrb[0].mxu0
  %v1152 = vadd.f32 0.0, %v1151
  %v1153 = vpop.f32.mrb[0].mxu0
  %1154 = vdwg.mxu0
  %v1156 = vsel %vm1002, %v340, 0
  %v1159 = vsel %vm1002, %v636, 0
  %1161 = vmatprep.subr.mxu0 0.0
  %1162 = vmatpush1.xpose.msra.mxu0 %v1159
  %1163 = vmatprep.subr.mxu0 0.0
  %1164 = vmatpush1.xpose.msra.mxu0 0.0
  %1165 = vmatprep.subr.mxu0 0.0
  %1166 = vmatpush1.xpose.msra.mxu0 0.0
  %1167 = vmatprep.subr.mxu0 0.0
  %1168 = vmatpush1.xpose.msra.mxu0 0.0
  %1169 = vmatprep.subr.mxu0 0.0
  %1170 = vmatpush1.xpose.msra.mxu0 0.0
  %1171 = vmatprep.subr.mxu0 0.0
  %1172 = vmatpush1.xpose.msra.mxu0 0.0
  %1173 = vmatprep.subr.mxu0 0.0
  %1174 = vmatpush1.xpose.msra.mxu0 0.0
  %1175 = vmatprep.subr.mxu0 0.0
  %1176 = vmatpush1.xpose.msra.mxu0 0.0
  %1177 = vmatprep.subr.mxu0 0.0
  %1178 = vmatpush1.xpose.msra.mxu0 0.0
  %1179 = vmatprep.subr.mxu0 0.0
  %1180 = vmatpush1.xpose.msra.mxu0 0.0
  %1181 = vmatprep.subr.mxu0 0.0
  %1182 = vmatpush1.xpose.msra.mxu0 0.0
  %1183 = vmatprep.subr.mxu0 0.0
  %1184 = vmatpush1.xpose.msra.mxu0 0.0
  %1185 = vmatprep.subr.mxu0 0.0
  %1186 = vmatpush1.xpose.msra.mxu0 0.0
  %1187 = vmatprep.subr.mxu0 0.0
  %1188 = vmatpush1.xpose.msra.mxu0 0.0
  %1189 = vmatprep.subr.mxu0 0.0
  %1190 = vmatpush1.xpose.msra.mxu0 0.0
  %1191 = vmatprep.subr.mxu0 0.0
  %1192 = vmatpush1.xpose.msra.mxu0 0.0
  %1193 = vmatprep.subr.mxu0 0.0
  %1194 = vmatpush1.xpose.msra.mxu0 0.0
  %1195 = vmatprep.subr.mxu0 0.0
  %1196 = vmatpush1.xpose.msra.mxu0 0.0
  %1197 = vmatprep.subr.mxu0 0.0
  %1198 = vmatpush1.xpose.msra.mxu0 0.0
  %1199 = vmatprep.subr.mxu0 0.0
  %1200 = vmatpush1.xpose.msra.mxu0 0.0
  %1201 = vmatprep.subr.mxu0 0.0
  %1202 = vmatpush1.xpose.msra.mxu0 0.0
  %1203 = vmatprep.subr.mxu0 0.0
  %1204 = vmatpush1.xpose.msra.mxu0 0.0
  %1205 = vmatprep.subr.mxu0 0.0
  %1206 = vmatpush1.xpose.msra.mxu0 0.0
  %1207 = vmatprep.subr.mxu0 0.0
  %1208 = vmatpush1.xpose.msra.mxu0 0.0
  %1209 = vmatprep.subr.mxu0 0.0
  %1210 = vmatpush1.xpose.msra.mxu0 0.0
  %1211 = vmatprep.subr.mxu0 0.0
  %1212 = vmatpush1.xpose.msra.mxu0 0.0
  %1213 = vmatprep.subr.mxu0 0.0
  %1214 = vmatpush1.xpose.msra.mxu0 0.0
  %1215 = vmatprep.subr.mxu0 0.0
  %1216 = vmatpush1.xpose.msra.mxu0 0.0
  %1217 = vmatprep.subr.mxu0 0.0
  %1218 = vmatpush1.xpose.msra.mxu0 0.0
  %1219 = vmatprep.subr.mxu0 0.0
  %1220 = vmatpush1.xpose.msra.mxu0 0.0
  %1221 = vmatprep.subr.mxu0 0.0
  %1222 = vmatpush1.xpose.msra.mxu0 0.0
  %1223 = vmatprep.subr.mxu0 0.0
  %1224 = vmatpush1.xpose.msra.mxu0 0.0
  %1225 = vmatprep.mubr.f32.mxu0 0.0
  %1226 = vmatmul.mubr.f32.gmra.mrb[0].mxu0 %v1156
  %v1227 = vpop.f32.mrb[0].mxu0
  %v1228 = vadd.f32 0.0, %v1227
  %v1229 = vpop.f32.mrb[0].mxu0
  %1230 = vdwg.mxu0
  %v1232 = vsel %vm1002, %v341, 0
  %v1235 = vsel %vm1002, %v637, 0
  %1237 = vmatprep.subr.mxu0 0.0
  %1238 = vmatpush1.xpose.msra.mxu0 %v1235
  %1239 = vmatprep.subr.mxu0 0.0
  %1240 = vmatpush1.xpose.msra.mxu0 0.0
  %1241 = vmatprep.subr.mxu0 0.0
  %1242 = vmatpush1.xpose.msra.mxu0 0.0
  %1243 = vmatprep.subr.mxu0 0.0
  %1244 = vmatpush1.xpose.msra.mxu0 0.0
  %1245 = vmatprep.subr.mxu0 0.0
  %1246 = vmatpush1.xpose.msra.mxu0 0.0
  %1247 = vmatprep.subr.mxu0 0.0
  %1248 = vmatpush1.xpose.msra.mxu0 0.0
  %1249 = vmatprep.subr.mxu0 0.0
  %1250 = vmatpush1.xpose.msra.mxu0 0.0
  %1251 = vmatprep.subr.mxu0 0.0
  %1252 = vmatpush1.xpose.msra.mxu0 0.0
  %1253 = vmatprep.subr.mxu0 0.0
  %1254 = vmatpush1.xpose.msra.mxu0 0.0
  %1255 = vmatprep.subr.mxu0 0.0
  %1256 = vmatpush1.xpose.msra.mxu0 0.0
  %1257 = vmatprep.subr.mxu0 0.0
  %1258 = vmatpush1.xpose.msra.mxu0 0.0
  %1259 = vmatprep.subr.mxu0 0.0
  %1260 = vmatpush1.xpose.msra.mxu0 0.0
  %1261 = vmatprep.subr.mxu0 0.0
  %1262 = vmatpush1.xpose.msra.mxu0 0.0
  %1263 = vmatprep.subr.mxu0 0.0
  %1264 = vmatpush1.xpose.msra.mxu0 0.0
  %1265 = vmatprep.subr.mxu0 0.0
  %1266 = vmatpush1.xpose.msra.mxu0 0.0
  %1267 = vmatprep.subr.mxu0 0.0
  %1268 = vmatpush1.xpose.msra.mxu0 0.0
  %1269 = vmatprep.subr.mxu0 0.0
  %1270 = vmatpush1.xpose.msra.mxu0 0.0
  %1271 = vmatprep.subr.mxu0 0.0
  %1272 = vmatpush1.xpose.msra.mxu0 0.0
  %1273 = vmatprep.subr.mxu0 0.0
  %1274 = vmatpush1.xpose.msra.mxu0 0.0
  %1275 = vmatprep.subr.mxu0 0.0
  %1276 = vmatpush1.xpose.msra.mxu0 0.0
  %1277 = vmatprep.subr.mxu0 0.0
  %1278 = vmatpush1.xpose.msra.mxu0 0.0
  %1279 = vmatprep.subr.mxu0 0.0
  %1280 = vmatpush1.xpose.msra.mxu0 0.0
  %1281 = vmatprep.subr.mxu0 0.0
  %1282 = vmatpush1.xpose.msra.mxu0 0.0
  %1283 = vmatprep.subr.mxu0 0.0
  %1284 = vmatpush1.xpose.msra.mxu0 0.0
  %1285 = vmatprep.subr.mxu0 0.0
  %1286 = vmatpush1.xpose.msra.mxu0 0.0
  %1287 = vmatprep.subr.mxu0 0.0
  %1288 = vmatpush1.xpose.msra.mxu0 0.0
  %1289 = vmatprep.subr.mxu0 0.0
  %1290 = vmatpush1.xpose.msra.mxu0 0.0
  %1291 = vmatprep.subr.mxu0 0.0
  %1292 = vmatpush1.xpose.msra.mxu0 0.0
  %1293 = vmatprep.subr.mxu0 0.0
  %1294 = vmatpush1.xpose.msra.mxu0 0.0
  %1295 = vmatprep.subr.mxu0 0.0
  %1296 = vmatpush1.xpose.msra.mxu0 0.0
  %1297 = vmatprep.subr.mxu0 0.0
  %1298 = vmatpush1.xpose.msra.mxu0 0.0
  %1299 = vmatprep.subr.mxu0 0.0
  %1300 = vmatpush1.xpose.msra.mxu0 0.0
  %1301 = vmatprep.mubr.f32.mxu0 0.0
  %1302 = vmatmul.mubr.f32.gmra.mrb[0].mxu0 %v1232
  %v1303 = vpop.f32.mrb[0].mxu0
  %v1304 = vadd.f32 0.0, %v1303
  %v1305 = vpop.f32.mrb[0].mxu0
  %1306 = vdwg.mxu0
  %v1308 = vsel %vm1002, %v406, 0
  %v1311 = vsel %vm1002, %v702, 0
  %1313 = vmatprep.subr.mxu0 0.0
  %1314 = vmatpush1.xpose.msra.mxu0 %v1311
  %1315 = vmatprep.subr.mxu0 0.0
  %1316 = vmatpush1.xpose.msra.mxu0 0.0
  %1317 = vmatprep.subr.mxu0 0.0
  %1318 = vmatpush1.xpose.msra.mxu0 0.0
  %1319 = vmatprep.subr.mxu0 0.0
  %1320 = vmatpush1.xpose.msra.mxu0 0.0
  %1321 = vmatprep.subr.mxu0 0.0
  %1322 = vmatpush1.xpose.msra.mxu0 0.0
  %1323 = vmatprep.subr.mxu0 0.0
  %1324 = vmatpush1.xpose.msra.mxu0 0.0
  %1325 = vmatprep.subr.mxu0 0.0
  %1326 = vmatpush1.xpose.msra.mxu0 0.0
  %1327 = vmatprep.subr.mxu0 0.0
  %1328 = vmatpush1.xpose.msra.mxu0 0.0
  %1329 = vmatprep.subr.mxu0 0.0
  %1330 = vmatpush1.xpose.msra.mxu0 0.0
  %1331 = vmatprep.subr.mxu0 0.0
  %1332 = vmatpush1.xpose.msra.mxu0 0.0
  %1333 = vmatprep.subr.mxu0 0.0
  %1334 = vmatpush1.xpose.msra.mxu0 0.0
  %1335 = vmatprep.subr.mxu0 0.0
  %1336 = vmatpush1.xpose.msra.mxu0 0.0
  %1337 = vmatprep.subr.mxu0 0.0
  %1338 = vmatpush1.xpose.msra.mxu0 0.0
  %1339 = vmatprep.subr.mxu0 0.0
  %1340 = vmatpush1.xpose.msra.mxu0 0.0
  %1341 = vmatprep.subr.mxu0 0.0
  %1342 = vmatpush1.xpose.msra.mxu0 0.0
  %1343 = vmatprep.subr.mxu0 0.0
  %1344 = vmatpush1.xpose.msra.mxu0 0.0
  %1345 = vmatprep.subr.mxu0 0.0
  %1346 = vmatpush1.xpose.msra.mxu0 0.0
  %1347 = vmatprep.subr.mxu0 0.0
  %1348 = vmatpush1.xpose.msra.mxu0 0.0
  %1349 = vmatprep.subr.mxu0 0.0
  %1350 = vmatpush1.xpose.msra.mxu0 0.0
  %1351 = vmatprep.subr.mxu0 0.0
  %1352 = vmatpush1.xpose.msra.mxu0 0.0
  %1353 = vmatprep.subr.mxu0 0.0
  %1354 = vmatpush1.xpose.msra.mxu0 0.0
  %1355 = vmatprep.subr.mxu0 0.0
  %1356 = vmatpush1.xpose.msra.mxu0 0.0
  %1357 = vmatprep.subr.mxu0 0.0
  %1358 = vmatpush1.xpose.msra.mxu0 0.0
  %1359 = vmatprep.subr.mxu0 0.0
  %1360 = vmatpush1.xpose.msra.mxu0 0.0
  %1361 = vmatprep.subr.mxu0 0.0
  %1362 = vmatpush1.xpose.msra.mxu0 0.0
  %1363 = vmatprep.subr.mxu0 0.0
  %1364 = vmatpush1.xpose.msra.mxu0 0.0
  %1365 = vmatprep.subr.mxu0 0.0
  %1366 = vmatpush1.xpose.msra.mxu0 0.0
  %1367 = vmatprep.subr.mxu0 0.0
  %1368 = vmatpush1.xpose.msra.mxu0 0.0
  %1369 = vmatprep.subr.mxu0 0.0
  %1370 = vmatpush1.xpose.msra.mxu0 0.0
  %1371 = vmatprep.subr.mxu0 0.0
  %1372 = vmatpush1.xpose.msra.mxu0 0.0
  %1373 = vmatprep.subr.mxu0 0.0
  %1374 = vmatpush1.xpose.msra.mxu0 0.0
  %1375 = vmatprep.subr.mxu0 0.0
  %1376 = vmatpush1.xpose.msra.mxu0 0.0
  %1377 = vmatprep.mubr.f32.mxu0 0.0
  %1378 = vmatmul.mubr.f32.gmra.mrb[0].mxu0 %v1308
  %v1379 = vpop.f32.mrb[0].mxu0
  %v1380 = vadd.f32 0.0, %v1379
  %v1381 = vpop.f32.mrb[0].mxu0
  %1382 = vdwg.mxu0
  %v1384 = vsel %vm1002, %v407, 0
  %v1387 = vsel %vm1002, %v703, 0
  %1389 = vmatprep.subr.mxu0 0.0
  %1390 = vmatpush1.xpose.msra.mxu0 %v1387
  %1391 = vmatprep.subr.mxu0 0.0
  %1392 = vmatpush1.xpose.msra.mxu0 0.0
  %1393 = vmatprep.subr.mxu0 0.0
  %1394 = vmatpush1.xpose.msra.mxu0 0.0
  %1395 = vmatprep.subr.mxu0 0.0
  %1396 = vmatpush1.xpose.msra.mxu0 0.0
  %1397 = vmatprep.subr.mxu0 0.0
  %1398 = vmatpush1.xpose.msra.mxu0 0.0
  %1399 = vmatprep.subr.mxu0 0.0
  %1400 = vmatpush1.xpose.msra.mxu0 0.0
  %1401 = vmatprep.subr.mxu0 0.0
  %1402 = vmatpush1.xpose.msra.mxu0 0.0
  %1403 = vmatprep.subr.mxu0 0.0
  %1404 = vmatpush1.xpose.msra.mxu0 0.0
  %1405 = vmatprep.subr.mxu0 0.0
  %1406 = vmatpush1.xpose.msra.mxu0 0.0
  %1407 = vmatprep.subr.mxu0 0.0
  %1408 = vmatpush1.xpose.msra.mxu0 0.0
  %1409 = vmatprep.subr.mxu0 0.0
  %1410 = vmatpush1.xpose.msra.mxu0 0.0
  %1411 = vmatprep.subr.mxu0 0.0
  %1412 = vmatpush1.xpose.msra.mxu0 0.0
  %1413 = vmatprep.subr.mxu0 0.0
  %1414 = vmatpush1.xpose.msra.mxu0 0.0
  %1415 = vmatprep.subr.mxu0 0.0
  %1416 = vmatpush1.xpose.msra.mxu0 0.0
  %1417 = vmatprep.subr.mxu0 0.0
  %1418 = vmatpush1.xpose.msra.mxu0 0.0
  %1419 = vmatprep.subr.mxu0 0.0
  %1420 = vmatpush1.xpose.msra.mxu0 0.0
  %1421 = vmatprep.subr.mxu0 0.0
  %1422 = vmatpush1.xpose.msra.mxu0 0.0
  %1423 = vmatprep.subr.mxu0 0.0
  %1424 = vmatpush1.xpose.msra.mxu0 0.0
  %1425 = vmatprep.subr.mxu0 0.0
  %1426 = vmatpush1.xpose.msra.mxu0 0.0
  %1427 = vmatprep.subr.mxu0 0.0
  %1428 = vmatpush1.xpose.msra.mxu0 0.0
  %1429 = vmatprep.subr.mxu0 0.0
  %1430 = vmatpush1.xpose.msra.mxu0 0.0
  %1431 = vmatprep.subr.mxu0 0.0
  %1432 = vmatpush1.xpose.msra.mxu0 0.0
  %1433 = vmatprep.subr.mxu0 0.0
  %1434 = vmatpush1.xpose.msra.mxu0 0.0
  %1435 = vmatprep.subr.mxu0 0.0
  %1436 = vmatpush1.xpose.msra.mxu0 0.0
  %1437 = vmatprep.subr.mxu0 0.0
  %1438 = vmatpush1.xpose.msra.mxu0 0.0
  %1439 = vmatprep.subr.mxu0 0.0
  %1440 = vmatpush1.xpose.msra.mxu0 0.0
  %1441 = vmatprep.subr.mxu0 0.0
  %1442 = vmatpush1.xpose.msra.mxu0 0.0
  %1443 = vmatprep.subr.mxu0 0.0
  %1444 = vmatpush1.xpose.msra.mxu0 0.0
  %1445 = vmatprep.subr.mxu0 0.0
  %1446 = vmatpush1.xpose.msra.mxu0 0.0
  %1447 = vmatprep.subr.mxu0 0.0
  %1448 = vmatpush1.xpose.msra.mxu0 0.0
  %1449 = vmatprep.subr.mxu0 0.0
  %1450 = vmatpush1.xpose.msra.mxu0 0.0
  %1451 = vmatprep.subr.mxu0 0.0
  %1452 = vmatpush1.xpose.msra.mxu0 0.0
  %1453 = vmatprep.mubr.f32.mxu0 0.0
  %1454 = vmatmul.mubr.f32.gmra.mrb[0].mxu0 %v1384
  %v1455 = vpop.f32.mrb[0].mxu0
  %v1456 = vadd.f32 0.0, %v1455
  %v1457 = vpop.f32.mrb[0].mxu0
  %1458 = vdwg.mxu0
  %v1460 = vsel %vm1002, %v408, 0
  %v1463 = vsel %vm1002, %v704, 0
  %1465 = vmatprep.subr.mxu0 0.0
  %1466 = vmatpush1.xpose.msra.mxu0 %v1463
  %1467 = vmatprep.subr.mxu0 0.0
  %1468 = vmatpush1.xpose.msra.mxu0 0.0
  %1469 = vmatprep.subr.mxu0 0.0
  %1470 = vmatpush1.xpose.msra.mxu0 0.0
  %1471 = vmatprep.subr.mxu0 0.0
  %1472 = vmatpush1.xpose.msra.mxu0 0.0
  %1473 = vmatprep.subr.mxu0 0.0
  %1474 = vmatpush1.xpose.msra.mxu0 0.0
  %1475 = vmatprep.subr.mxu0 0.0
  %1476 = vmatpush1.xpose.msra.mxu0 0.0
  %1477 = vmatprep.subr.mxu0 0.0
  %1478 = vmatpush1.xpose.msra.mxu0 0.0
  %1479 = vmatprep.subr.mxu0 0.0
  %1480 = vmatpush1.xpose.msra.mxu0 0.0
  %1481 = vmatprep.subr.mxu0 0.0
  %1482 = vmatpush1.xpose.msra.mxu0 0.0
  %1483 = vmatprep.subr.mxu0 0.0
  %1484 = vmatpush1.xpose.msra.mxu0 0.0
  %1485 = vmatprep.subr.mxu0 0.0
  %1486 = vmatpush1.xpose.msra.mxu0 0.0
  %1487 = vmatprep.subr.mxu0 0.0
  %1488 = vmatpush1.xpose.msra.mxu0 0.0
  %1489 = vmatprep.subr.mxu0 0.0
  %1490 = vmatpush1.xpose.msra.mxu0 0.0
  %1491 = vmatprep.subr.mxu0 0.0
  %1492 = vmatpush1.xpose.msra.mxu0 0.0
  %1493 = vmatprep.subr.mxu0 0.0
  %1494 = vmatpush1.xpose.msra.mxu0 0.0
  %1495 = vmatprep.subr.mxu0 0.0
  %1496 = vmatpush1.xpose.msra.mxu0 0.0
  %1497 = vmatprep.subr.mxu0 0.0
  %1498 = vmatpush1.xpose.msra.mxu0 0.0
  %1499 = vmatprep.subr.mxu0 0.0
  %1500 = vmatpush1.xpose.msra.mxu0 0.0
  %1501 = vmatprep.subr.mxu0 0.0
  %1502 = vmatpush1.xpose.msra.mxu0 0.0
  %1503 = vmatprep.subr.mxu0 0.0
  %1504 = vmatpush1.xpose.msra.mxu0 0.0
  %1505 = vmatprep.subr.mxu0 0.0
  %1506 = vmatpush1.xpose.msra.mxu0 0.0
  %1507 = vmatprep.subr.mxu0 0.0
  %1508 = vmatpush1.xpose.msra.mxu0 0.0
  %1509 = vmatprep.subr.mxu0 0.0
  %1510 = vmatpush1.xpose.msra.mxu0 0.0
  %1511 = vmatprep.subr.mxu0 0.0
  %1512 = vmatpush1.xpose.msra.mxu0 0.0
  %1513 = vmatprep.subr.mxu0 0.0
  %1514 = vmatpush1.xpose.msra.mxu0 0.0
  %1515 = vmatprep.subr.mxu0 0.0
  %1516 = vmatpush1.xpose.msra.mxu0 0.0
  %1517 = vmatprep.subr.mxu0 0.0
  %1518 = vmatpush1.xpose.msra.mxu0 0.0
  %1519 = vmatprep.subr.mxu0 0.0
  %1520 = vmatpush1.xpose.msra.mxu0 0.0
  %1521 = vmatprep.subr.mxu0 0.0
  %1522 = vmatpush1.xpose.msra.mxu0 0.0
  %1523 = vmatprep.subr.mxu0 0.0
  %1524 = vmatpush1.xpose.msra.mxu0 0.0
  %1525 = vmatprep.subr.mxu0 0.0
  %1526 = vmatpush1.xpose.msra.mxu0 0.0
  %1527 = vmatprep.subr.mxu0 0.0
  %1528 = vmatpush1.xpose.msra.mxu0 0.0
  %1529 = vmatprep.mubr.f32.mxu0 0.0
  %1530 = vmatmul.mubr.f32.gmra.mrb[0].mxu0 %v1460
  %v1531 = vpop.f32.mrb[0].mxu0
  %v1532 = vadd.f32 0.0, %v1531
  %v1533 = vpop.f32.mrb[0].mxu0
  %1534 = vdwg.mxu0
  %v1536 = vsel %vm1002, %v409, 0
  %v1539 = vsel %vm1002, %v705, 0
  %1541 = vmatprep.subr.mxu0 0.0
  %1542 = vmatpush1.xpose.msra.mxu0 %v1539
  %1543 = vmatprep.subr.mxu0 0.0
  %1544 = vmatpush1.xpose.msra.mxu0 0.0
  %1545 = vmatprep.subr.mxu0 0.0
  %1546 = vmatpush1.xpose.msra.mxu0 0.0
  %1547 = vmatprep.subr.mxu0 0.0
  %1548 = vmatpush1.xpose.msra.mxu0 0.0
  %1549 = vmatprep.subr.mxu0 0.0
  %1550 = vmatpush1.xpose.msra.mxu0 0.0
  %1551 = vmatprep.subr.mxu0 0.0
  %1552 = vmatpush1.xpose.msra.mxu0 0.0
  %1553 = vmatprep.subr.mxu0 0.0
  %1554 = vmatpush1.xpose.msra.mxu0 0.0
  %1555 = vmatprep.subr.mxu0 0.0
  %1556 = vmatpush1.xpose.msra.mxu0 0.0
  %1557 = vmatprep.subr.mxu0 0.0
  %1558 = vmatpush1.xpose.msra.mxu0 0.0
  %1559 = vmatprep.subr.mxu0 0.0
  %1560 = vmatpush1.xpose.msra.mxu0 0.0
  %1561 = vmatprep.subr.mxu0 0.0
  %1562 = vmatpush1.xpose.msra.mxu0 0.0
  %1563 = vmatprep.subr.mxu0 0.0
  %1564 = vmatpush1.xpose.msra.mxu0 0.0
  %1565 = vmatprep.subr.mxu0 0.0
  %1566 = vmatpush1.xpose.msra.mxu0 0.0
  %1567 = vmatprep.subr.mxu0 0.0
  %1568 = vmatpush1.xpose.msra.mxu0 0.0
  %1569 = vmatprep.subr.mxu0 0.0
  %1570 = vmatpush1.xpose.msra.mxu0 0.0
  %1571 = vmatprep.subr.mxu0 0.0
  %1572 = vmatpush1.xpose.msra.mxu0 0.0
  %1573 = vmatprep.subr.mxu0 0.0
  %1574 = vmatpush1.xpose.msra.mxu0 0.0
  %1575 = vmatprep.subr.mxu0 0.0
  %1576 = vmatpush1.xpose.msra.mxu0 0.0
  %1577 = vmatprep.subr.mxu0 0.0
  %1578 = vmatpush1.xpose.msra.mxu0 0.0
  %1579 = vmatprep.subr.mxu0 0.0
  %1580 = vmatpush1.xpose.msra.mxu0 0.0
  %1581 = vmatprep.subr.mxu0 0.0
  %1582 = vmatpush1.xpose.msra.mxu0 0.0
  %1583 = vmatprep.subr.mxu0 0.0
  %1584 = vmatpush1.xpose.msra.mxu0 0.0
  %1585 = vmatprep.subr.mxu0 0.0
  %1586 = vmatpush1.xpose.msra.mxu0 0.0
  %1587 = vmatprep.subr.mxu0 0.0
  %1588 = vmatpush1.xpose.msra.mxu0 0.0
  %1589 = vmatprep.subr.mxu0 0.0
  %1590 = vmatpush1.xpose.msra.mxu0 0.0
  %1591 = vmatprep.subr.mxu0 0.0
  %1592 = vmatpush1.xpose.msra.mxu0 0.0
  %1593 = vmatprep.subr.mxu0 0.0
  %1594 = vmatpush1.xpose.msra.mxu0 0.0
  %1595 = vmatprep.subr.mxu0 0.0
  %1596 = vmatpush1.xpose.msra.mxu0 0.0
  %1597 = vmatprep.subr.mxu0 0.0
  %1598 = vmatpush1.xpose.msra.mxu0 0.0
  %1599 = vmatprep.subr.mxu0 0.0
  %1600 = vmatpush1.xpose.msra.mxu0 0.0
  %1601 = vmatprep.subr.mxu0 0.0
  %1602 = vmatpush1.xpose.msra.mxu0 0.0
  %1603 = vmatprep.subr.mxu0 0.0
  %1604 = vmatpush1.xpose.msra.mxu0 0.0
  %1605 = vmatprep.mubr.f32.mxu0 0.0
  %1606 = vmatmul.mubr.f32.gmra.mrb[0].mxu0 %v1536
  %v1607 = vpop.f32.mrb[0].mxu0
  %v1608 = vadd.f32 0.0, %v1607
  %v1609 = vpop.f32.mrb[0].mxu0
  %1610 = vdwg.mxu0
  %v1611 = vmul.f32 %v1076, 0.35355338
  %v1612 = vmul.f32 %v1152, 0.35355338
  %v1613 = vmul.f32 %v1228, 0.35355338
  %v1614 = vmul.f32 %v1304, 0.35355338
  %v1615 = vmul.f32 %v1380, 0.35355338
  %v1616 = vmul.f32 %v1456, 0.35355338
  %v1617 = vmul.f32 %v1532, 0.35355338
  %v1618 = vmul.f32 %v1608, 0.35355338
  %v1619 = vld [vmem:[%s5] sm:$0xff]
  %v1620 = vld [vmem:[%s5 + $0x8] sm:$0xff]
  %v1621 = vld [vmem:[%s5 + $0x10] sm:$0xff]
  %v1622 = vld [vmem:[%s5 + $0x18] sm:$0xff]
  %v1623 = vld [vmem:[%s5 + $0x20] sm:$0xff]
  %v1624 = vld [vmem:[%s5 + $0x28] sm:$0xff]
  %v1625 = vld [vmem:[%s5 + $0x30] sm:$0xff]
  %v1626 = vld [vmem:[%s5 + $0x38] sm:$0xff]
  %v1627 = vadd.f32 %v1611, %v1619
  %v1628 = vadd.f32 %v1612, %v1620
  %v1629 = vadd.f32 %v1613, %v1621
  %v1630 = vadd.f32 %v1614, %v1622
  %v1631 = vadd.f32 %v1615, %v1623
  %v1632 = vadd.f32 %v1616, %v1624
  %v1633 = vadd.f32 %v1617, %v1625
  %v1634 = vadd.f32 %v1618, %v1626
  %v1635 = vsel %vm1002, %v1627, -inf
  %1636 = vmax.xlane.f32.xlu0 %v1635
  %v1637 = vpop.xlane.xlu0 %1636
  %v1638 = vsel %vm1002, %v1628, -inf
  %1639 = vmax.xlane.f32.xlu0 %v1638
  %v1640 = vpop.xlane.xlu0 %1639
  %v1641 = vsel %vm1002, %v1629, -inf
  %1642 = vmax.xlane.f32.xlu0 %v1641
  %v1643 = vpop.xlane.xlu0 %1642
  %v1644 = vsel %vm1002, %v1630, -inf
  %1645 = vmax.xlane.f32.xlu0 %v1644
  %v1646 = vpop.xlane.xlu0 %1645
  %v1647 = vsel %vm1002, %v1631, -inf
  %1648 = vmax.xlane.f32.xlu0 %v1647
  %v1649 = vpop.xlane.xlu0 %1648
  %v1650 = vsel %vm1002, %v1632, -inf
  %1651 = vmax.xlane.f32.xlu0 %v1650
  %v1652 = vpop.xlane.xlu0 %1651
  %v1653 = vsel %vm1002, %v1633, -inf
  %1654 = vmax.xlane.f32.xlu0 %v1653
  %v1655 = vpop.xlane.xlu0 %1654
  %v1656 = vsel %vm1002, %v1634, -inf
  %1657 = vmax.xlane.f32.xlu0 %v1656
  %v1658 = vpop.xlane.xlu0 %1657
  %v1659 = vsub.f32 %v1627, %v1637
  %v1660 = vsub.f32 %v1628, %v1640
  %v1661 = vsub.f32 %v1629, %v1643
  %v1662 = vsub.f32 %v1630, %v1646
  %v1663 = vsub.f32 %v1631, %v1649
  %v1664 = vsub.f32 %v1632, %v1652
  %v1665 = vsub.f32 %v1633, %v1655
  %v1666 = vsub.f32 %v1634, %v1658
  %v1667 = vmul.f32 %v1659, 1.442695
  %v1668 = vpow.pop %v1667
  %v1669 = vmul.f32 %v1660, 1.442695
  %v1670 = vpow.pop %v1669
  %v1671 = vmul.f32 %v1661, 1.442695
  %v1672 = vpow.pop %v1671
  %v1673 = vmul.f32 %v1662, 1.442695
  %v1674 = vpow.pop %v1673
  %v1675 = vmul.f32 %v1663, 1.442695
  %v1676 = vpow.pop %v1675
  %v1677 = vmul.f32 %v1664, 1.442695
  %v1678 = vpow.pop %v1677
  %v1679 = vmul.f32 %v1665, 1.442695
  %v1680 = vpow.pop %v1679
  %v1681 = vmul.f32 %v1666, 1.442695
  %v1682 = vpow.pop %v1681
  %v1683 = vsel %vm1002, %v1668, 0.0
  %1684 = vadd.xlane.f32.xlu0 %v1683
  %v1685 = vpop.xlane.xlu0 %1684
  %v1686 = vsel %vm1002, %v1670, 0.0
  %1687 = vadd.xlane.f32.xlu0 %v1686
  %v1688 = vpop.xlane.xlu0 %1687
  %v1689 = vsel %vm1002, %v1672, 0.0
  %1690 = vadd.xlane.f32.xlu0 %v1689
  %v1691 = vpop.xlane.xlu0 %1690
  %v1692 = vsel %vm1002, %v1674, 0.0
  %1693 = vadd.xlane.f32.xlu0 %v1692
  %v1694 = vpop.xlane.xlu0 %1693
  %v1695 = vsel %vm1002, %v1676, 0.0
  %1696 = vadd.xlane.f32.xlu0 %v1695
  %v1697 = vpop.xlane.xlu0 %1696
  %v1698 = vsel %vm1002, %v1678, 0.0
  %1699 = vadd.xlane.f32.xlu0 %v1698
  %v1700 = vpop.xlane.xlu0 %1699
  %v1701 = vsel %vm1002, %v1680, 0.0
  %1702 = vadd.xlane.f32.xlu0 %v1701
  %v1703 = vpop.xlane.xlu0 %1702
  %v1704 = vsel %vm1002, %v1682, 0.0
  %1705 = vadd.xlane.f32.xlu0 %v1704
  %v1706 = vpop.xlane.xlu0 %1705
  %v1707 = vrcp.pop %v1685
  %v1708 = vrcp.pop %v1688
  %v1709 = vrcp.pop %v1691
  %v1710 = vrcp.pop %v1694
  %v1711 = vrcp.pop %v1697
  %v1712 = vrcp.pop %v1700
  %v1713 = vrcp.pop %v1703
  %v1714 = vrcp.pop %v1706
  %v1715 = vmul.f32 %v1668, %v1707
  %v1716 = vmul.f32 %v1670, %v1708
  %v1717 = vmul.f32 %v1672, %v1709
  %v1718 = vmul.f32 %v1674, %v1710
  %v1719 = vmul.f32 %v1676, %v1711
  %v1720 = vmul.f32 %v1678, %v1712
  %v1721 = vmul.f32 %v1680, %v1713
  %v1722 = vmul.f32 %v1682, %v1714
  %v1724 = vsel %vm1002, %v1715, 0
  %1726 = vmatprep.subr.mxu0 0.0
  %1727 = vmatpush1.msra.mxu0 %v930
  %1728 = vmatprep.subr.mxu0 0.0
  %1729 = vmatpush1.msra.mxu0 0.0
  %1730 = vmatprep.subr.mxu0 0.0
  %1731 = vmatpush1.msra.mxu0 0.0
  %1732 = vmatprep.subr.mxu0 0.0
  %1733 = vmatpush1.msra.mxu0 0.0
  %1734 = vmatprep.subr.mxu0 0.0
  %1735 = vmatpush1.msra.mxu0 0.0
  %1736 = vmatprep.subr.mxu0 0.0
  %1737 = vmatpush1.msra.mxu0 0.0
  %1738 = vmatprep.subr.mxu0 0.0
  %1739 = vmatpush1.msra.mxu0 0.0
  %1740 = vmatprep.subr.mxu0 0.0
  %1741 = vmatpush1.msra.mxu0 0.0
  %1742 = vmatprep.subr.mxu0 0.0
  %1743 = vmatpush1.msra.mxu0 0.0
  %1744 = vmatprep.subr.mxu0 0.0
  %1745 = vmatpush1.msra.mxu0 0.0
  %1746 = vmatprep.subr.mxu0 0.0
  %1747 = vmatpush1.msra.mxu0 0.0
  %1748 = vmatprep.subr.mxu0 0.0
  %1749 = vmatpush1.msra.mxu0 0.0
  %1750 = vmatprep.subr.mxu0 0.0
  %1751 = vmatpush1.msra.mxu0 0.0
  %1752 = vmatprep.subr.mxu0 0.0
  %1753 = vmatpush1.msra.mxu0 0.0
  %1754 = vmatprep.subr.mxu0 0.0
  %1755 = vmatpush1.msra.mxu0 0.0
  %1756 = vmatprep.subr.mxu0 0.0
  %1757 = vmatpush1.msra.mxu0 0.0
  %1758 = vmatprep.subr.mxu0 0.0
  %1759 = vmatpush1.msra.mxu0 0.0
  %1760 = vmatprep.subr.mxu0 0.0
  %1761 = vmatpush1.msra.mxu0 0.0
  %1762 = vmatprep.subr.mxu0 0.0
  %1763 = vmatpush1.msra.mxu0 0.0
  %1764 = vmatprep.subr.mxu0 0.0
  %1765 = vmatpush1.msra.mxu0 0.0
  %1766 = vmatprep.subr.mxu0 0.0
  %1767 = vmatpush1.msra.mxu0 0.0
  %1768 = vmatprep.subr.mxu0 0.0
  %1769 = vmatpush1.msra.mxu0 0.0
  %1770 = vmatprep.subr.mxu0 0.0
  %1771 = vmatpush1.msra.mxu0 0.0
  %1772 = vmatprep.subr.mxu0 0.0
  %1773 = vmatpush1.msra.mxu0 0.0
  %1774 = vmatprep.subr.mxu0 0.0
  %1775 = vmatpush1.msra.mxu0 0.0
  %1776 = vmatprep.subr.mxu0 0.0
  %1777 = vmatpush1.msra.mxu0 0.0
  %1778 = vmatprep.subr.mxu0 0.0
  %1779 = vmatpush1.msra.mxu0 0.0
  %1780 = vmatprep.subr.mxu0 0.0
  %1781 = vmatpush1.msra.mxu0 0.0
  %1782 = vmatprep.subr.mxu0 0.0
  %1783 = vmatpush1.msra.mxu0 0.0
  %1784 = vmatprep.subr.mxu0 0.0
  %1785 = vmatpush1.msra.mxu0 0.0
  %1786 = vmatprep.subr.mxu0 0.0
  %1787 = vmatpush1.msra.mxu0 0.0
  %1788 = vmatprep.subr.mxu0 0.0
  %1789 = vmatpush1.msra.mxu0 0.0
  %1790 = vmatprep.mubr.f32.mxu0 0.0
  %1791 = vmatmul.mubr.f32.gmra.mrb[0].mxu0 %v1724
  %v1792 = vpop.f32.mrb[0].mxu0
  %v1793 = vadd.f32 0.0, %v1792
  %v1794 = vpop.f32.mrb[0].mxu0
  %1795 = vdwg.mxu0
  %v1797 = vsel %vm1002, %v1716, 0
  %1799 = vmatprep.subr.mxu0 0.0
  %1800 = vmatpush1.msra.mxu0 %v931
  %1801 = vmatprep.subr.mxu0 0.0
  %1802 = vmatpush1.msra.mxu0 0.0
  %1803 = vmatprep.subr.mxu0 0.0
  %1804 = vmatpush1.msra.mxu0 0.0
  %1805 = vmatprep.subr.mxu0 0.0
  %1806 = vmatpush1.msra.mxu0 0.0
  %1807 = vmatprep.subr.mxu0 0.0
  %1808 = vmatpush1.msra.mxu0 0.0
  %1809 = vmatprep.subr.mxu0 0.0
  %1810 = vmatpush1.msra.mxu0 0.0
  %1811 = vmatprep.subr.mxu0 0.0
  %1812 = vmatpush1.msra.mxu0 0.0
  %1813 = vmatprep.subr.mxu0 0.0
  %1814 = vmatpush1.msra.mxu0 0.0
  %1815 = vmatprep.subr.mxu0 0.0
  %1816 = vmatpush1.msra.mxu0 0.0
  %1817 = vmatprep.subr.mxu0 0.0
  %1818 = vmatpush1.msra.mxu0 0.0
  %1819 = vmatprep.subr.mxu0 0.0
  %1820 = vmatpush1.msra.mxu0 0.0
  %1821 = vmatprep.subr.mxu0 0.0
  %1822 = vmatpush1.msra.mxu0 0.0
  %1823 = vmatprep.subr.mxu0 0.0
  %1824 = vmatpush1.msra.mxu0 0.0
  %1825 = vmatprep.subr.mxu0 0.0
  %1826 = vmatpush1.msra.mxu0 0.0
  %1827 = vmatprep.subr.mxu0 0.0
  %1828 = vmatpush1.msra.mxu0 0.0
  %1829 = vmatprep.subr.mxu0 0.0
  %1830 = vmatpush1.msra.mxu0 0.0
  %1831 = vmatprep.subr.mxu0 0.0
  %1832 = vmatpush1.msra.mxu0 0.0
  %1833 = vmatprep.subr.mxu0 0.0
  %1834 = vmatpush1.msra.mxu0 0.0
  %1835 = vmatprep.subr.mxu0 0.0
  %1836 = vmatpush1.msra.mxu0 0.0
  %1837 = vmatprep.subr.mxu0 0.0
  %1838 = vmatpush1.msra.mxu0 0.0
  %1839 = vmatprep.subr.mxu0 0.0
  %1840 = vmatpush1.msra.mxu0 0.0
  %1841 = vmatprep.subr.mxu0 0.0
  %1842 = vmatpush1.msra.mxu0 0.0
  %1843 = vmatprep.subr.mxu0 0.0
  %1844 = vmatpush1.msra.mxu0 0.0
  %1845 = vmatprep.subr.mxu0 0.0
  %1846 = vmatpush1.msra.mxu0 0.0
  %1847 = vmatprep.subr.mxu0 0.0
  %1848 = vmatpush1.msra.mxu0 0.0
  %1849 = vmatprep.subr.mxu0 0.0
  %1850 = vmatpush1.msra.mxu0 0.0
  %1851 = vmatprep.subr.mxu0 0.0
  %1852 = vmatpush1.msra.mxu0 0.0
  %1853 = vmatprep.subr.mxu0 0.0
  %1854 = vmatpush1.msra.mxu0 0.0
  %1855 = vmatprep.subr.mxu0 0.0
  %1856 = vmatpush1.msra.mxu0 0.0
  %1857 = vmatprep.subr.mxu0 0.0
  %1858 = vmatpush1.msra.mxu0 0.0
  %1859 = vmatprep.subr.mxu0 0.0
  %1860 = vmatpush1.msra.mxu0 0.0
  %1861 = vmatprep.subr.mxu0 0.0
  %1862 = vmatpush1.msra.mxu0 0.0
  %1863 = vmatprep.mubr.f32.mxu0 0.0
  %1864 = vmatmul.mubr.f32.gmra.mrb[0].mxu0 %v1797
  %v1865 = vpop.f32.mrb[0].mxu0
  %v1866 = vadd.f32 0.0, %v1865
  %v1867 = vpop.f32.mrb[0].mxu0
  %1868 = vdwg.mxu0
  %v1870 = vsel %vm1002, %v1717, 0
  %1872 = vmatprep.subr.mxu0 0.0
  %1873 = vmatpush1.msra.mxu0 %v932
  %1874 = vmatprep.subr.mxu0 0.0
  %1875 = vmatpush1.msra.mxu0 0.0
  %1876 = vmatprep.subr.mxu0 0.0
  %1877 = vmatpush1.msra.mxu0 0.0
  %1878 = vmatprep.subr.mxu0 0.0
  %1879 = vmatpush1.msra.mxu0 0.0
  %1880 = vmatprep.subr.mxu0 0.0
  %1881 = vmatpush1.msra.mxu0 0.0
  %1882 = vmatprep.subr.mxu0 0.0
  %1883 = vmatpush1.msra.mxu0 0.0
  %1884 = vmatprep.subr.mxu0 0.0
  %1885 = vmatpush1.msra.mxu0 0.0
  %1886 = vmatprep.subr.mxu0 0.0
  %1887 = vmatpush1.msra.mxu0 0.0
  %1888 = vmatprep.subr.mxu0 0.0
  %1889 = vmatpush1.msra.mxu0 0.0
  %1890 = vmatprep.subr.mxu0 0.0
  %1891 = vmatpush1.msra.mxu0 0.0
  %1892 = vmatprep.subr.mxu0 0.0
  %1893 = vmatpush1.msra.mxu0 0.0
  %1894 = vmatprep.subr.mxu0 0.0
  %1895 = vmatpush1.msra.mxu0 0.0
  %1896 = vmatprep.subr.mxu0 0.0
  %1897 = vmatpush1.msra.mxu0 0.0
  %1898 = vmatprep.subr.mxu0 0.0
  %1899 = vmatpush1.msra.mxu0 0.0
  %1900 = vmatprep.subr.mxu0 0.0
  %1901 = vmatpush1.msra.mxu0 0.0
  %1902 = vmatprep.subr.mxu0 0.0
  %1903 = vmatpush1.msra.mxu0 0.0
  %1904 = vmatprep.subr.mxu0 0.0
  %1905 = vmatpush1.msra.mxu0 0.0
  %1906 = vmatprep.subr.mxu0 0.0
  %1907 = vmatpush1.msra.mxu0 0.0
  %1908 = vmatprep.subr.mxu0 0.0
  %1909 = vmatpush1.msra.mxu0 0.0
  %1910 = vmatprep.subr.mxu0 0.0
  %1911 = vmatpush1.msra.mxu0 0.0
  %1912 = vmatprep.subr.mxu0 0.0
  %1913 = vmatpush1.msra.mxu0 0.0
  %1914 = vmatprep.subr.mxu0 0.0
  %1915 = vmatpush1.msra.mxu0 0.0
  %1916 = vmatprep.subr.mxu0 0.0
  %1917 = vmatpush1.msra.mxu0 0.0
  %1918 = vmatprep.subr.mxu0 0.0
  %1919 = vmatpush1.msra.mxu0 0.0
  %1920 = vmatprep.subr.mxu0 0.0
  %1921 = vmatpush1.msra.mxu0 0.0
  %1922 = vmatprep.subr.mxu0 0.0
  %1923 = vmatpush1.msra.mxu0 0.0
  %1924 = vmatprep.subr.mxu0 0.0
  %1925 = vmatpush1.msra.mxu0 0.0
  %1926 = vmatprep.subr.mxu0 0.0
  %1927 = vmatpush1.msra.mxu0 0.0
  %1928 = vmatprep.subr.mxu0 0.0
  %1929 = vmatpush1.msra.mxu0 0.0
  %1930 = vmatprep.subr.mxu0 0.0
  %1931 = vmatpush1.msra.mxu0 0.0
  %1932 = vmatprep.subr.mxu0 0.0
  %1933 = vmatpush1.msra.mxu0 0.0
  %1934 = vmatprep.subr.mxu0 0.0
  %1935 = vmatpush1.msra.mxu0 0.0
  %1936 = vmatprep.mubr.f32.mxu0 0.0
  %1937 = vmatmul.mubr.f32.gmra.mrb[0].mxu0 %v1870
  %v1938 = vpop.f32.mrb[0].mxu0
  %v1939 = vadd.f32 0.0, %v1938
  %v1940 = vpop.f32.mrb[0].mxu0
  %1941 = vdwg.mxu0
  %v1943 = vsel %vm1002, %v1718, 0
  %1945 = vmatprep.subr.mxu0 0.0
  %1946 = vmatpush1.msra.mxu0 %v933
  %1947 = vmatprep.subr.mxu0 0.0
  %1948 = vmatpush1.msra.mxu0 0.0
  %1949 = vmatprep.subr.mxu0 0.0
  %1950 = vmatpush1.msra.mxu0 0.0
  %1951 = vmatprep.subr.mxu0 0.0
  %1952 = vmatpush1.msra.mxu0 0.0
  %1953 = vmatprep.subr.mxu0 0.0
  %1954 = vmatpush1.msra.mxu0 0.0
  %1955 = vmatprep.subr.mxu0 0.0
  %1956 = vmatpush1.msra.mxu0 0.0
  %1957 = vmatprep.subr.mxu0 0.0
  %1958 = vmatpush1.msra.mxu0 0.0
  %1959 = vmatprep.subr.mxu0 0.0
  %1960 = vmatpush1.msra.mxu0 0.0
  %1961 = vmatprep.subr.mxu0 0.0
  %1962 = vmatpush1.msra.mxu0 0.0
  %1963 = vmatprep.subr.mxu0 0.0
  %1964 = vmatpush1.msra.mxu0 0.0
  %1965 = vmatprep.subr.mxu0 0.0
  %1966 = vmatpush1.msra.mxu0 0.0
  %1967 = vmatprep.subr.mxu0 0.0
  %1968 = vmatpush1.msra.mxu0 0.0
  %1969 = vmatprep.subr.mxu0 0.0
  %1970 = vmatpush1.msra.mxu0 0.0
  %1971 = vmatprep.subr.mxu0 0.0
  %1972 = vmatpush1.msra.mxu0 0.0
  %1973 = vmatprep.subr.mxu0 0.0
  %1974 = vmatpush1.msra.mxu0 0.0
  %1975 = vmatprep.subr.mxu0 0.0
  %1976 = vmatpush1.msra.mxu0 0.0
  %1977 = vmatprep.subr.mxu0 0.0
  %1978 = vmatpush1.msra.mxu0 0.0
  %1979 = vmatprep.subr.mxu0 0.0
  %1980 = vmatpush1.msra.mxu0 0.0
  %1981 = vmatprep.subr.mxu0 0.0
  %1982 = vmatpush1.msra.mxu0 0.0
  %1983 = vmatprep.subr.mxu0 0.0
  %1984 = vmatpush1.msra.mxu0 0.0
  %1985 = vmatprep.subr.mxu0 0.0
  %1986 = vmatpush1.msra.mxu0 0.0
  %1987 = vmatprep.subr.mxu0 0.0
  %1988 = vmatpush1.msra.mxu0 0.0
  %1989 = vmatprep.subr.mxu0 0.0
  %1990 = vmatpush1.msra.mxu0 0.0
  %1991 = vmatprep.subr.mxu0 0.0
  %1992 = vmatpush1.msra.mxu0 0.0
  %1993 = vmatprep.subr.mxu0 0.0
  %1994 = vmatpush1.msra.mxu0 0.0
  %1995 = vmatprep.subr.mxu0 0.0
  %1996 = vmatpush1.msra.mxu0 0.0
  %1997 = vmatprep.subr.mxu0 0.0
  %1998 = vmatpush1.msra.mxu0 0.0
  %1999 = vmatprep.subr.mxu0 0.0
  %2000 = vmatpush1.msra.mxu0 0.0
  %2001 = vmatprep.subr.mxu0 0.0
  %2002 = vmatpush1.msra.mxu0 0.0
  %2003 = vmatprep.subr.mxu0 0.0
  %2004 = vmatpush1.msra.mxu0 0.0
  %2005 = vmatprep.subr.mxu0 0.0
  %2006 = vmatpush1.msra.mxu0 0.0
  %2007 = vmatprep.subr.mxu0 0.0
  %2008 = vmatpush1.msra.mxu0 0.0
  %2009 = vmatprep.mubr.f32.mxu0 0.0
  %2010 = vmatmul.mubr.f32.gmra.mrb[0].mxu0 %v1943
  %v2011 = vpop.f32.mrb[0].mxu0
  %v2012 = vadd.f32 0.0, %v2011
  %v2013 = vpop.f32.mrb[0].mxu0
  %2014 = vdwg.mxu0
  %v2016 = vsel %vm1002, %v1719, 0
  %2018 = vmatprep.subr.mxu0 0.0
  %2019 = vmatpush1.msra.mxu0 %v998
  %2020 = vmatprep.subr.mxu0 0.0
  %2021 = vmatpush1.msra.mxu0 0.0
  %2022 = vmatprep.subr.mxu0 0.0
  %2023 = vmatpush1.msra.mxu0 0.0
  %2024 = vmatprep.subr.mxu0 0.0
  %2025 = vmatpush1.msra.mxu0 0.0
  %2026 = vmatprep.subr.mxu0 0.0
  %2027 = vmatpush1.msra.mxu0 0.0
  %2028 = vmatprep.subr.mxu0 0.0
  %2029 = vmatpush1.msra.mxu0 0.0
  %2030 = vmatprep.subr.mxu0 0.0
  %2031 = vmatpush1.msra.mxu0 0.0
  %2032 = vmatprep.subr.mxu0 0.0
  %2033 = vmatpush1.msra.mxu0 0.0
  %2034 = vmatprep.subr.mxu0 0.0
  %2035 = vmatpush1.msra.mxu0 0.0
  %2036 = vmatprep.subr.mxu0 0.0
  %2037 = vmatpush1.msra.mxu0 0.0
  %2038 = vmatprep.subr.mxu0 0.0
  %2039 = vmatpush1.msra.mxu0 0.0
  %2040 = vmatprep.subr.mxu0 0.0
  %2041 = vmatpush1.msra.mxu0 0.0
  %2042 = vmatprep.subr.mxu0 0.0
  %2043 = vmatpush1.msra.mxu0 0.0
  %2044 = vmatprep.subr.mxu0 0.0
  %2045 = vmatpush1.msra.mxu0 0.0
  %2046 = vmatprep.subr.mxu0 0.0
  %2047 = vmatpush1.msra.mxu0 0.0
  %2048 = vmatprep.subr.mxu0 0.0
  %2049 = vmatpush1.msra.mxu0 0.0
  %2050 = vmatprep.subr.mxu0 0.0
  %2051 = vmatpush1.msra.mxu0 0.0
  %2052 = vmatprep.subr.mxu0 0.0
  %2053 = vmatpush1.msra.mxu0 0.0
  %2054 = vmatprep.subr.mxu0 0.0
  %2055 = vmatpush1.msra.mxu0 0.0
  %2056 = vmatprep.subr.mxu0 0.0
  %2057 = vmatpush1.msra.mxu0 0.0
  %2058 = vmatprep.subr.mxu0 0.0
  %2059 = vmatpush1.msra.mxu0 0.0
  %2060 = vmatprep.subr.mxu0 0.0
  %2061 = vmatpush1.msra.mxu0 0.0
  %2062 = vmatprep.subr.mxu0 0.0
  %2063 = vmatpush1.msra.mxu0 0.0
  %2064 = vmatprep.subr.mxu0 0.0
  %2065 = vmatpush1.msra.mxu0 0.0
  %2066 = vmatprep.subr.mxu0 0.0
  %2067 = vmatpush1.msra.mxu0 0.0
  %2068 = vmatprep.subr.mxu0 0.0
  %2069 = vmatpush1.msra.mxu0 0.0
  %2070 = vmatprep.subr.mxu0 0.0
  %2071 = vmatpush1.msra.mxu0 0.0
  %2072 = vmatprep.subr.mxu0 0.0
  %2073 = vmatpush1.msra.mxu0 0.0
  %2074 = vmatprep.subr.mxu0 0.0
  %2075 = vmatpush1.msra.mxu0 0.0
  %2076 = vmatprep.subr.mxu0 0.0
  %2077 = vmatpush1.msra.mxu0 0.0
  %2078 = vmatprep.subr.mxu0 0.0
  %2079 = vmatpush1.msra.mxu0 0.0
  %2080 = vmatprep.subr.mxu0 0.0
  %2081 = vmatpush1.msra.mxu0 0.0
  %2082 = vmatprep.mubr.f32.mxu0 0.0
  %2083 = vmatmul.mubr.f32.gmra.mrb[0].mxu0 %v2016
  %v2084 = vpop.f32.mrb[0].mxu0
  %v2085 = vadd.f32 0.0, %v2084
  %v2086 = vpop.f32.mrb[0].mxu0
  %2087 = vdwg.mxu0
  %v2089 = vsel %vm1002, %v1720, 0
  %2091 = vmatprep.subr.mxu0 0.0
  %2092 = vmatpush1.msra.mxu0 %v999
  %2093 = vmatprep.subr.mxu0 0.0
  %2094 = vmatpush1.msra.mxu0 0.0
  %2095 = vmatprep.subr.mxu0 0.0
  %2096 = vmatpush1.msra.mxu0 0.0
  %2097 = vmatprep.subr.mxu0 0.0
  %2098 = vmatpush1.msra.mxu0 0.0
  %2099 = vmatprep.subr.mxu0 0.0
  %2100 = vmatpush1.msra.mxu0 0.0
  %2101 = vmatprep.subr.mxu0 0.0
  %2102 = vmatpush1.msra.mxu0 0.0
  %2103 = vmatprep.subr.mxu0 0.0
  %2104 = vmatpush1.msra.mxu0 0.0
  %2105 = vmatprep.subr.mxu0 0.0
  %2106 = vmatpush1.msra.mxu0 0.0
  %2107 = vmatprep.subr.mxu0 0.0
  %2108 = vmatpush1.msra.mxu0 0.0
  %2109 = vmatprep.subr.mxu0 0.0
  %2110 = vmatpush1.msra.mxu0 0.0
  %2111 = vmatprep.subr.mxu0 0.0
  %2112 = vmatpush1.msra.mxu0 0.0
  %2113 = vmatprep.subr.mxu0 0.0
  %2114 = vmatpush1.msra.mxu0 0.0
  %2115 = vmatprep.subr.mxu0 0.0
  %2116 = vmatpush1.msra.mxu0 0.0
  %2117 = vmatprep.subr.mxu0 0.0
  %2118 = vmatpush1.msra.mxu0 0.0
  %2119 = vmatprep.subr.mxu0 0.0
  %2120 = vmatpush1.msra.mxu0 0.0
  %2121 = vmatprep.subr.mxu0 0.0
  %2122 = vmatpush1.msra.mxu0 0.0
  %2123 = vmatprep.subr.mxu0 0.0
  %2124 = vmatpush1.msra.mxu0 0.0
  %2125 = vmatprep.subr.mxu0 0.0
  %2126 = vmatpush1.msra.mxu0 0.0
  %2127 = vmatprep.subr.mxu0 0.0
  %2128 = vmatpush1.msra.mxu0 0.0
  %2129 = vmatprep.subr.mxu0 0.0
  %2130 = vmatpush1.msra.mxu0 0.0
  %2131 = vmatprep.subr.mxu0 0.0
  %2132 = vmatpush1.msra.mxu0 0.0
  %2133 = vmatprep.subr.mxu0 0.0
  %2134 = vmatpush1.msra.mxu0 0.0
  %2135 = vmatprep.subr.mxu0 0.0
  %2136 = vmatpush1.msra.mxu0 0.0
  %2137 = vmatprep.subr.mxu0 0.0
  %2138 = vmatpush1.msra.mxu0 0.0
  %2139 = vmatprep.subr.mxu0 0.0
  %2140 = vmatpush1.msra.mxu0 0.0
  %2141 = vmatprep.subr.mxu0 0.0
  %2142 = vmatpush1.msra.mxu0 0.0
  %2143 = vmatprep.subr.mxu0 0.0
  %2144 = vmatpush1.msra.mxu0 0.0
  %2145 = vmatprep.subr.mxu0 0.0
  %2146 = vmatpush1.msra.mxu0 0.0
  %2147 = vmatprep.subr.mxu0 0.0
  %2148 = vmatpush1.msra.mxu0 0.0
  %2149 = vmatprep.subr.mxu0 0.0
  %2150 = vmatpush1.msra.mxu0 0.0
  %2151 = vmatprep.subr.mxu0 0.0
  %2152 = vmatpush1.msra.mxu0 0.0
  %2153 = vmatprep.subr.mxu0 0.0
  %2154 = vmatpush1.msra.mxu0 0.0
  %2155 = vmatprep.mubr.f32.mxu0 0.0
  %2156 = vmatmul.mubr.f32.gmra.mrb[0].mxu0 %v2089
  %v2157 = vpop.f32.mrb[0].mxu0
  %v2158 = vadd.f32 0.0, %v2157
  %v2159 = vpop.f32.mrb[0].mxu0
  %2160 = vdwg.mxu0
  %v2162 = vsel %vm1002, %v1721, 0
  %2164 = vmatprep.subr.mxu0 0.0
  %2165 = vmatpush1.msra.mxu0 %v1000
  %2166 = vmatprep.subr.mxu0 0.0
  %2167 = vmatpush1.msra.mxu0 0.0
  %2168 = vmatprep.subr.mxu0 0.0
  %2169 = vmatpush1.msra.mxu0 0.0
  %2170 = vmatprep.subr.mxu0 0.0
  %2171 = vmatpush1.msra.mxu0 0.0
  %2172 = vmatprep.subr.mxu0 0.0
  %2173 = vmatpush1.msra.mxu0 0.0
  %2174 = vmatprep.subr.mxu0 0.0
  %2175 = vmatpush1.msra.mxu0 0.0
  %2176 = vmatprep.subr.mxu0 0.0
  %2177 = vmatpush1.msra.mxu0 0.0
  %2178 = vmatprep.subr.mxu0 0.0
  %2179 = vmatpush1.msra.mxu0 0.0
  %2180 = vmatprep.subr.mxu0 0.0
  %2181 = vmatpush1.msra.mxu0 0.0
  %2182 = vmatprep.subr.mxu0 0.0
  %2183 = vmatpush1.msra.mxu0 0.0
  %2184 = vmatprep.subr.mxu0 0.0
  %2185 = vmatpush1.msra.mxu0 0.0
  %2186 = vmatprep.subr.mxu0 0.0
  %2187 = vmatpush1.msra.mxu0 0.0
  %2188 = vmatprep.subr.mxu0 0.0
  %2189 = vmatpush1.msra.mxu0 0.0
  %2190 = vmatprep.subr.mxu0 0.0
  %2191 = vmatpush1.msra.mxu0 0.0
  %2192 = vmatprep.subr.mxu0 0.0
  %2193 = vmatpush1.msra.mxu0 0.0
  %2194 = vmatprep.subr.mxu0 0.0
  %2195 = vmatpush1.msra.mxu0 0.0
  %2196 = vmatprep.subr.mxu0 0.0
  %2197 = vmatpush1.msra.mxu0 0.0
  %2198 = vmatprep.subr.mxu0 0.0
  %2199 = vmatpush1.msra.mxu0 0.0
  %2200 = vmatprep.subr.mxu0 0.0
  %2201 = vmatpush1.msra.mxu0 0.0
  %2202 = vmatprep.subr.mxu0 0.0
  %2203 = vmatpush1.msra.mxu0 0.0
  %2204 = vmatprep.subr.mxu0 0.0
  %2205 = vmatpush1.msra.mxu0 0.0
  %2206 = vmatprep.subr.mxu0 0.0
  %2207 = vmatpush1.msra.mxu0 0.0
  %2208 = vmatprep.subr.mxu0 0.0
  %2209 = vmatpush1.msra.mxu0 0.0
  %2210 = vmatprep.subr.mxu0 0.0
  %2211 = vmatpush1.msra.mxu0 0.0
  %2212 = vmatprep.subr.mxu0 0.0
  %2213 = vmatpush1.msra.mxu0 0.0
  %2214 = vmatprep.subr.mxu0 0.0
  %2215 = vmatpush1.msra.mxu0 0.0
  %2216 = vmatprep.subr.mxu0 0.0
  %2217 = vmatpush1.msra.mxu0 0.0
  %2218 = vmatprep.subr.mxu0 0.0
  %2219 = vmatpush1.msra.mxu0 0.0
  %2220 = vmatprep.subr.mxu0 0.0
  %2221 = vmatpush1.msra.mxu0 0.0
  %2222 = vmatprep.subr.mxu0 0.0
  %2223 = vmatpush1.msra.mxu0 0.0
  %2224 = vmatprep.subr.mxu0 0.0
  %2225 = vmatpush1.msra.mxu0 0.0
  %2226 = vmatprep.subr.mxu0 0.0
  %2227 = vmatpush1.msra.mxu0 0.0
  %2228 = vmatprep.mubr.f32.mxu0 0.0
  %2229 = vmatmul.mubr.f32.gmra.mrb[0].mxu0 %v2162
  %v2230 = vpop.f32.mrb[0].mxu0
  %v2231 = vadd.f32 0.0, %v2230
  %v2232 = vpop.f32.mrb[0].mxu0
  %2233 = vdwg.mxu0
  %v2235 = vsel %vm1002, %v1722, 0
  %2237 = vmatprep.subr.mxu0 0.0
  %2238 = vmatpush1.msra.mxu0 %v1001
  %2239 = vmatprep.subr.mxu0 0.0
  %2240 = vmatpush1.msra.mxu0 0.0
  %2241 = vmatprep.subr.mxu0 0.0
  %2242 = vmatpush1.msra.mxu0 0.0
  %2243 = vmatprep.subr.mxu0 0.0
  %2244 = vmatpush1.msra.mxu0 0.0
  %2245 = vmatprep.subr.mxu0 0.0
  %2246 = vmatpush1.msra.mxu0 0.0
  %2247 = vmatprep.subr.mxu0 0.0
  %2248 = vmatpush1.msra.mxu0 0.0
  %2249 = vmatprep.subr.mxu0 0.0
  %2250 = vmatpush1.msra.mxu0 0.0
  %2251 = vmatprep.subr.mxu0 0.0
  %2252 = vmatpush1.msra.mxu0 0.0
  %2253 = vmatprep.subr.mxu0 0.0
  %2254 = vmatpush1.msra.mxu0 0.0
  %2255 = vmatprep.subr.mxu0 0.0
  %2256 = vmatpush1.msra.mxu0 0.0
  %2257 = vmatprep.subr.mxu0 0.0
  %2258 = vmatpush1.msra.mxu0 0.0
  %2259 = vmatprep.subr.mxu0 0.0
  %2260 = vmatpush1.msra.mxu0 0.0
  %2261 = vmatprep.subr.mxu0 0.0
  %2262 = vmatpush1.msra.mxu0 0.0
  %2263 = vmatprep.subr.mxu0 0.0
  %2264 = vmatpush1.msra.mxu0 0.0
  %2265 = vmatprep.subr.mxu0 0.0
  %2266 = vmatpush1.msra.mxu0 0.0
  %2267 = vmatprep.subr.mxu0 0.0
  %2268 = vmatpush1.msra.mxu0 0.0
  %2269 = vmatprep.subr.mxu0 0.0
  %2270 = vmatpush1.msra.mxu0 0.0
  %2271 = vmatprep.subr.mxu0 0.0
  %2272 = vmatpush1.msra.mxu0 0.0
  %2273 = vmatprep.subr.mxu0 0.0
  %2274 = vmatpush1.msra.mxu0 0.0
  %2275 = vmatprep.subr.mxu0 0.0
  %2276 = vmatpush1.msra.mxu0 0.0
  %2277 = vmatprep.subr.mxu0 0.0
  %2278 = vmatpush1.msra.mxu0 0.0
  %2279 = vmatprep.subr.mxu0 0.0
  %2280 = vmatpush1.msra.mxu0 0.0
  %2281 = vmatprep.subr.mxu0 0.0
  %2282 = vmatpush1.msra.mxu0 0.0
  %2283 = vmatprep.subr.mxu0 0.0
  %2284 = vmatpush1.msra.mxu0 0.0
  %2285 = vmatprep.subr.mxu0 0.0
  %2286 = vmatpush1.msra.mxu0 0.0
  %2287 = vmatprep.subr.mxu0 0.0
  %2288 = vmatpush1.msra.mxu0 0.0
  %2289 = vmatprep.subr.mxu0 0.0
  %2290 = vmatpush1.msra.mxu0 0.0
  %2291 = vmatprep.subr.mxu0 0.0
  %2292 = vmatpush1.msra.mxu0 0.0
  %2293 = vmatprep.subr.mxu0 0.0
  %2294 = vmatpush1.msra.mxu0 0.0
  %2295 = vmatprep.subr.mxu0 0.0
  %2296 = vmatpush1.msra.mxu0 0.0
  %2297 = vmatprep.subr.mxu0 0.0
  %2298 = vmatpush1.msra.mxu0 0.0
  %2299 = vmatprep.subr.mxu0 0.0
  %2300 = vmatpush1.msra.mxu0 0.0
  %2301 = vmatprep.mubr.f32.mxu0 0.0
  %2302 = vmatmul.mubr.f32.gmra.mrb[0].mxu0 %v2235
  %v2303 = vpop.f32.mrb[0].mxu0
  %v2304 = vadd.f32 0.0, %v2303
  %v2305 = vpop.f32.mrb[0].mxu0
  %2306 = vdwg.mxu0
  %v2307 = vcombine.low %v1793, %v1939
  %v2308 = vcombine.high %v1793, %v1939
  %v2310 = vunpack.c.l.s4 1983009808
  %v2311 = vunpack.c.0.s8 %v2310
  %v2312 = vlaneseq
  %v2313 = vshrl.u32 %v2312, 7
  %v2314 = vsub.s32 %v2311, %v2313
  %v2315 = vrot.slane %v2307, %v2314
  %v2317 = vunpack.c.l.s4 1983009808
  %v2318 = vunpack.c.0.s8 %v2317
  %v2319 = vlaneseq
  %v2320 = vshrl.u32 %v2319, 7
  %v2321 = vsub.s32 %v2318, %v2320
  %v2322 = vrot.slane %v2308, %v2321
  %v2323 = vcombine.low %v1866, %v2012
  %v2324 = vcombine.high %v1866, %v2012
  %v2326 = vunpack.c.l.s4 1983009808
  %v2327 = vunpack.c.0.s8 %v2326
  %v2328 = vlaneseq
  %v2329 = vshrl.u32 %v2328, 7
  %v2330 = vsub.s32 %v2327, %v2329
  %v2331 = vrot.slane %v2323, %v2330
  %v2333 = vunpack.c.l.s4 1983009808
  %v2334 = vunpack.c.0.s8 %v2333
  %v2335 = vlaneseq
  %v2336 = vshrl.u32 %v2335, 7
  %v2337 = vsub.s32 %v2334, %v2336
  %v2338 = vrot.slane %v2324, %v2337
  %v2339 = vcombine.low %v2315, %v2331
  %v2340 = vcombine.high %v2315, %v2331
  %v2342 = vunpack.c.l.s4 1934713408
  %v2343 = vunpack.c.0.s8 %v2342
  %v2344 = vlaneseq
  %v2345 = vshrl.u32 %v2344, 7
  %v2346 = vsub.s32 %v2343, %v2345
  %v2347 = vrot.slane %v2339, %v2346
  %v2349 = vunpack.c.l.s4 1934713408
  %v2350 = vunpack.c.0.s8 %v2349
  %v2351 = vlaneseq
  %v2352 = vshrl.u32 %v2351, 7
  %v2353 = vsub.s32 %v2350, %v2352
  %v2354 = vrot.slane %v2340, %v2353
  %v2355 = vcombine.low %v2322, %v2338
  %v2356 = vcombine.high %v2322, %v2338
  %v2358 = vunpack.c.l.s4 1934713408
  %v2359 = vunpack.c.0.s8 %v2358
  %v2360 = vlaneseq
  %v2361 = vshrl.u32 %v2360, 7
  %v2362 = vsub.s32 %v2359, %v2361
  %v2363 = vrot.slane %v2355, %v2362
  %v2365 = vunpack.c.l.s4 1934713408
  %v2366 = vunpack.c.0.s8 %v2365
  %v2367 = vlaneseq
  %v2368 = vshrl.u32 %v2367, 7
  %v2369 = vsub.s32 %v2366, %v2368
  %v2370 = vrot.slane %v2356, %v2369
  %v2371 = vcombine.high %v2347, 0.0
  %v2372 = vcombine.high %v2354, 0.0
  %v2373 = vcombine.high %v2363, 0.0
  %v2374 = vcombine.high %v2370, 0.0
  %v2375 = vcombine.low %v2085, %v2231
  %v2376 = vcombine.high %v2085, %v2231
  %v2378 = vunpack.c.l.s4 1983009808
  %v2379 = vunpack.c.0.s8 %v2378
  %v2380 = vlaneseq
  %v2381 = vshrl.u32 %v2380, 7
  %v2382 = vsub.s32 %v2379, %v2381
  %v2383 = vrot.slane %v2375, %v2382
  %v2385 = vunpack.c.l.s4 1983009808
  %v2386 = vunpack.c.0.s8 %v2385
  %v2387 = vlaneseq
  %v2388 = vshrl.u32 %v2387, 7
  %v2389 = vsub.s32 %v2386, %v2388
  %v2390 = vrot.slane %v2376, %v2389
  %v2391 = vcombine.low %v2158, %v2304
  %v2392 = vcombine.high %v2158, %v2304
  %v2394 = vunpack.c.l.s4 1983009808
  %v2395 = vunpack.c.0.s8 %v2394
  %v2396 = vlaneseq
  %v2397 = vshrl.u32 %v2396, 7
  %v2398 = vsub.s32 %v2395, %v2397
  %v2399 = vrot.slane %v2391, %v2398
  %v2401 = vunpack.c.l.s4 1983009808
  %v2402 = vunpack.c.0.s8 %v2401
  %v2403 = vlaneseq
  %v2404 = vshrl.u32 %v2403, 7
  %v2405 = vsub.s32 %v2402, %v2404
  %v2406 = vrot.slane %v2392, %v2405
  %v2407 = vcombine.low %v2383, %v2399
  %v2408 = vcombine.high %v2383, %v2399
  %v2410 = vunpack.c.l.s4 1934713408
  %v2411 = vunpack.c.0.s8 %v2410
  %v2412 = vlaneseq
  %v2413 = vshrl.u32 %v2412, 7
  %v2414 = vsub.s32 %v2411, %v2413
  %v2415 = vrot.slane %v2407, %v2414
  %v2417 = vunpack.c.l.s4 1934713408
  %v2418 = vunpack.c.0.s8 %v2417
  %v2419 = vlaneseq
  %v2420 = vshrl.u32 %v2419, 7
  %v2421 = vsub.s32 %v2418, %v2420
  %v2422 = vrot.slane %v2408, %v2421
  %v2423 = vcombine.low %v2390, %v2406
  %v2424 = vcombine.high %v2390, %v2406
  %v2426 = vunpack.c.l.s4 1934713408
  %v2427 = vunpack.c.0.s8 %v2426
  %v2428 = vlaneseq
  %v2429 = vshrl.u32 %v2428, 7
  %v2430 = vsub.s32 %v2427, %v2429
  %v2431 = vrot.slane %v2423, %v2430
  %v2433 = vunpack.c.l.s4 1934713408
  %v2434 = vunpack.c.0.s8 %v2433
  %v2435 = vlaneseq
  %v2436 = vshrl.u32 %v2435, 7
  %v2437 = vsub.s32 %v2434, %v2436
  %v2438 = vrot.slane %v2424, %v2437
  %v2439 = vcombine.high %v2415, 0.0
  %v2440 = vcombine.high %v2422, 0.0
  %v2441 = vcombine.high %v2431, 0.0
  %v2442 = vcombine.high %v2438, 0.0
  %v2443 = vcombine.low %v2347, %v2354
  %v2445 = vunpack.c.l.s4 1983009808
  %v2446 = vunpack.c.0.s8 %v2445
  %v2447 = vlaneseq
  %v2448 = vshrl.u32 %v2447, 7
  %v2449 = vsub.s32 %v2446, %v2448
  %v2450 = vrot.slane %v2443, %v2449
  %v2451 = vcombine.low %v2371, %v2372
  %v2453 = vunpack.c.l.s4 1983009808
  %v2454 = vunpack.c.0.s8 %v2453
  %v2455 = vlaneseq
  %v2456 = vshrl.u32 %v2455, 7
  %v2457 = vsub.s32 %v2454, %v2456
  %v2458 = vrot.slane %v2451, %v2457
  %v2459 = vcombine.low %v2363, %v2370
  %v2461 = vunpack.c.l.s4 1983009808
  %v2462 = vunpack.c.0.s8 %v2461
  %v2463 = vlaneseq
  %v2464 = vshrl.u32 %v2463, 7
  %v2465 = vsub.s32 %v2462, %v2464
  %v2466 = vrot.slane %v2459, %v2465
  %v2467 = vcombine.low %v2373, %v2374
  %v2469 = vunpack.c.l.s4 1983009808
  %v2470 = vunpack.c.0.s8 %v2469
  %v2471 = vlaneseq
  %v2472 = vshrl.u32 %v2471, 7
  %v2473 = vsub.s32 %v2470, %v2472
  %v2474 = vrot.slane %v2467, %v2473
  %v2475 = vcombine.low %v2450, %v2458
  %v2476 = vcombine.high %v2450, %v2458
  %v2478 = vunpack.c.l.s4 1934713408
  %v2479 = vunpack.c.0.s8 %v2478
  %v2480 = vlaneseq
  %v2481 = vshrl.u32 %v2480, 7
  %v2482 = vsub.s32 %v2479, %v2481
  %v2483 = vrot.slane %v2475, %v2482
  %v2485 = vunpack.c.l.s4 1934713408
  %v2486 = vunpack.c.0.s8 %v2485
  %v2487 = vlaneseq
  %v2488 = vshrl.u32 %v2487, 7
  %v2489 = vsub.s32 %v2486, %v2488
  %v2490 = vrot.slane %v2476, %v2489
  %v2491 = vcombine.low %v2466, %v2474
  %v2492 = vcombine.high %v2466, %v2474
  %v2494 = vunpack.c.l.s4 1934713408
  %v2495 = vunpack.c.0.s8 %v2494
  %v2496 = vlaneseq
  %v2497 = vshrl.u32 %v2496, 7
  %v2498 = vsub.s32 %v2495, %v2497
  %v2499 = vrot.slane %v2491, %v2498
  %v2501 = vunpack.c.l.s4 1934713408
  %v2502 = vunpack.c.0.s8 %v2501
  %v2503 = vlaneseq
  %v2504 = vshrl.u32 %v2503, 7
  %v2505 = vsub.s32 %v2502, %v2504
  %v2506 = vrot.slane %v2492, %v2505
  %v2507 = vcombine.low %v2483, %v2499
  %v2508 = vcombine.high %v2483, %v2499
  %v2509 = vcombine.low %v2490, %v2506
  %v2510 = vcombine.high %v2490, %v2506
  %v2511 = vcombine.low %v2415, %v2422
  %v2513 = vunpack.c.l.s4 1983009808
  %v2514 = vunpack.c.0.s8 %v2513
  %v2515 = vlaneseq
  %v2516 = vshrl.u32 %v2515, 7
  %v2517 = vsub.s32 %v2514, %v2516
  %v2518 = vrot.slane %v2511, %v2517
  %v2519 = vcombine.low %v2439, %v2440
  %v2521 = vunpack.c.l.s4 1983009808
  %v2522 = vunpack.c.0.s8 %v2521
  %v2523 = vlaneseq
  %v2524 = vshrl.u32 %v2523, 7
  %v2525 = vsub.s32 %v2522, %v2524
  %v2526 = vrot.slane %v2519, %v2525
  %v2527 = vcombine.low %v2431, %v2438
  %v2529 = vunpack.c.l.s4 1983009808
  %v2530 = vunpack.c.0.s8 %v2529
  %v2531 = vlaneseq
  %v2532 = vshrl.u32 %v2531, 7
  %v2533 = vsub.s32 %v2530, %v2532
  %v2534 = vrot.slane %v2527, %v2533
  %v2535 = vcombine.low %v2441, %v2442
  %v2537 = vunpack.c.l.s4 1983009808
  %v2538 = vunpack.c.0.s8 %v2537
  %v2539 = vlaneseq
  %v2540 = vshrl.u32 %v2539, 7
  %v2541 = vsub.s32 %v2538, %v2540
  %v2542 = vrot.slane %v2535, %v2541
  %v2543 = vcombine.low %v2518, %v2526
  %v2544 = vcombine.high %v2518, %v2526
  %v2546 = vunpack.c.l.s4 1934713408
  %v2547 = vunpack.c.0.s8 %v2546
  %v2548 = vlaneseq
  %v2549 = vshrl.u32 %v2548, 7
  %v2550 = vsub.s32 %v2547, %v2549
  %v2551 = vrot.slane %v2543, %v2550
  %v2553 = vunpack.c.l.s4 1934713408
  %v2554 = vunpack.c.0.s8 %v2553
  %v2555 = vlaneseq
  %v2556 = vshrl.u32 %v2555, 7
  %v2557 = vsub.s32 %v2554, %v2556
  %v2558 = vrot.slane %v2544, %v2557
  %v2559 = vcombine.low %v2534, %v2542
  %v2560 = vcombine.high %v2534, %v2542
  %v2562 = vunpack.c.l.s4 1934713408
  %v2563 = vunpack.c.0.s8 %v2562
  %v2564 = vlaneseq
  %v2565 = vshrl.u32 %v2564, 7
  %v2566 = vsub.s32 %v2563, %v2565
  %v2567 = vrot.slane %v2559, %v2566
  %v2569 = vunpack.c.l.s4 1934713408
  %v2570 = vunpack.c.0.s8 %v2569
  %v2571 = vlaneseq
  %v2572 = vshrl.u32 %v2571, 7
  %v2573 = vsub.s32 %v2570, %v2572
  %v2574 = vrot.slane %v2560, %v2573
  %v2575 = vcombine.low %v2551, %v2567
  %v2576 = vcombine.high %v2551, %v2567
  %v2577 = vcombine.low %v2558, %v2574
  %v2578 = vcombine.high %v2558, %v2574
  %2581 = vrot.lane.b32.xlu0 %v2508, 8
  %v2582 = vpop.permute.xlu0 %2581
  %2583 = vrot.lane.b32.xlu0 %v2576, 8
  %v2584 = vpop.permute.xlu0 %2583
  %2589 = vrot.lane.b32.xlu0 %v2509, 16
  %v2590 = vpop.permute.xlu0 %2589
  %2591 = vrot.lane.b32.xlu0 %v2577, 16
  %v2592 = vpop.permute.xlu0 %2591
  %2597 = vrot.lane.b32.xlu0 %v2510, 24
  %v2598 = vpop.permute.xlu0 %2597
  %2599 = vrot.lane.b32.xlu0 %v2578, 24
  %v2600 = vpop.permute.xlu0 %2599
  %v2603 = vsel %vm1002, %v2507, %v2582
  %v2604 = vsel %vm1002, %v2575, %v2584
  %vm2605 = vcmask 130048
  %v2606 = vsel %vm2605, %v2603, %v2590
  %v2607 = vsel %vm2605, %v2604, %v2592
  %vm2608 = vcmask 195584
  %v2609 = vsel %vm2608, %v2606, %v2598
  %v2610 = vsel %vm2608, %v2607, %v2600
  %v2611 = vld [vmem:[%s3] sm:$0xff]
  %v2612 = vld [vmem:[%s3 + $0x8] sm:$0xff]
  %v2613 = vld [vmem:[%s3 + $0x10] sm:$0xff]
  %v2614 = vld [vmem:[%s3 + $0x18] sm:$0xff]
  %v2615 = vld [vmem:[%s4] sm:$0x1]
  %v2617 = vlaneseq
  %v2618 = vshrl.u32 %v2617, 7
  %v2619 = vsub.s32 0, %v2618
  %v2620 = vrot.slane %v2615, %v2619
  %v2623 = vsel %vm36, %v2609, 0
  %v2626 = vsel %vm36, %v2610, 0
  %2628 = vmatprep.subr.mxu0 0.0
  %2629 = vmatpush1.msra.mxu0 %v2611
  %2630 = vmatprep.subr.mxu0 0.0
  %2631 = vmatpush1.msra.mxu0 %v2612
  %2632 = vmatprep.subr.mxu0 0.0
  %2633 = vmatpush1.msra.mxu0 %v2613
  %2634 = vmatprep.subr.mxu0 0.0
  %2635 = vmatpush1.msra.mxu0 %v2614
  %2636 = vmatprep.subr.mxu0 0.0
  %2637 = vmatpush1.msra.mxu0 0.0
  %2638 = vmatprep.subr.mxu0 0.0
  %2639 = vmatpush1.msra.mxu0 0.0
  %2640 = vmatprep.subr.mxu0 0.0
  %2641 = vmatpush1.msra.mxu0 0.0
  %2642 = vmatprep.subr.mxu0 0.0
  %2643 = vmatpush1.msra.mxu0 0.0
  %2644 = vmatprep.subr.mxu0 0.0
  %2645 = vmatpush1.msra.mxu0 0.0
  %2646 = vmatprep.subr.mxu0 0.0
  %2647 = vmatpush1.msra.mxu0 0.0
  %2648 = vmatprep.subr.mxu0 0.0
  %2649 = vmatpush1.msra.mxu0 0.0
  %2650 = vmatprep.subr.mxu0 0.0
  %2651 = vmatpush1.msra.mxu0 0.0
  %2652 = vmatprep.subr.mxu0 0.0
  %2653 = vmatpush1.msra.mxu0 0.0
  %2654 = vmatprep.subr.mxu0 0.0
  %2655 = vmatpush1.msra.mxu0 0.0
  %2656 = vmatprep.subr.mxu0 0.0
  %2657 = vmatpush1.msra.mxu0 0.0
  %2658 = vmatprep.subr.mxu0 0.0
  %2659 = vmatpush1.msra.mxu0 0.0
  %2660 = vmatprep.subr.mxu0 0.0
  %2661 = vmatpush1.msra.mxu0 0.0
  %2662 = vmatprep.subr.mxu0 0.0
  %2663 = vmatpush1.msra.mxu0 0.0
  %2664 = vmatprep.subr.mxu0 0.0
  %2665 = vmatpush1.msra.mxu0 0.0
  %2666 = vmatprep.subr.mxu0 0.0
  %2667 = vmatpush1.msra.mxu0 0.0
  %2668 = vmatprep.subr.mxu0 0.0
  %2669 = vmatpush1.msra.mxu0 0.0
  %2670 = vmatprep.subr.mxu0 0.0
  %2671 = vmatpush1.msra.mxu0 0.0
  %2672 = vmatprep.subr.mxu0 0.0
  %2673 = vmatpush1.msra.mxu0 0.0
  %2674 = vmatprep.subr.mxu0 0.0
  %2675 = vmatpush1.msra.mxu0 0.0
  %2676 = vmatprep.subr.mxu0 0.0
  %2677 = vmatpush1.msra.mxu0 0.0
  %2678 = vmatprep.subr.mxu0 0.0
  %2679 = vmatpush1.msra.mxu0 0.0
  %2680 = vmatprep.subr.mxu0 0.0
  %2681 = vmatpush1.msra.mxu0 0.0
  %2682 = vmatprep.subr.mxu0 0.0
  %2683 = vmatpush1.msra.mxu0 0.0
  %2684 = vmatprep.subr.mxu0 0.0
  %2685 = vmatpush1.msra.mxu0 0.0
  %2686 = vmatprep.subr.mxu0 0.0
  %2687 = vmatpush1.msra.mxu0 0.0
  %2688 = vmatprep.subr.mxu0 0.0
  %2689 = vmatpush1.msra.mxu0 0.0
  %2690 = vmatprep.subr.mxu0 0.0
  %2691 = vmatpush1.msra.mxu0 0.0
  %2692 = vmatprep.mubr.f32.mxu0 0.0
  %2693 = vmatmul.mubr.f32.gmra.mrb[0].mxu0 %v2623
  %v2694 = vpop.f32.mrb[0].mxu0
  %v2695 = vadd.f32 %v2620, %v2694
  %v2696 = vpop.f32.mrb[0].mxu0
  %2697 = vmatprep.mubr.f32.mxu0 0.0
  %2698 = vmatmul.mubr.f32.gmra.mrb[0].mxu0 %v2626
  %v2699 = vpop.f32.mrb[0].mxu0
  %v2700 = vadd.f32 %v2620, %v2699
  %v2701 = vpop.f32.mrb[0].mxu0
  %2702 = vdwg.mxu0
  %v2703 = vcombine.low %v1715, %v1717
  %v2704 = vcombine.high %v1715, %v1717
  %v2706 = vunpack.c.l.s4 1983009808
  %v2707 = vunpack.c.0.s8 %v2706
  %v2708 = vlaneseq
  %v2709 = vshrl.u32 %v2708, 7
  %v2710 = vsub.s32 %v2707, %v2709
  %v2711 = vrot.slane %v2703, %v2710
  %v2713 = vunpack.c.l.s4 1983009808
  %v2714 = vunpack.c.0.s8 %v2713
  %v2715 = vlaneseq
  %v2716 = vshrl.u32 %v2715, 7
  %v2717 = vsub.s32 %v2714, %v2716
  %v2718 = vrot.slane %v2704, %v2717
  %v2719 = vcombine.low %v1716, %v1718
  %v2720 = vcombine.high %v1716, %v1718
  %v2722 = vunpack.c.l.s4 1983009808
  %v2723 = vunpack.c.0.s8 %v2722
  %v2724 = vlaneseq
  %v2725 = vshrl.u32 %v2724, 7
  %v2726 = vsub.s32 %v2723, %v2725
  %v2727 = vrot.slane %v2719, %v2726
  %v2729 = vunpack.c.l.s4 1983009808
  %v2730 = vunpack.c.0.s8 %v2729
  %v2731 = vlaneseq
  %v2732 = vshrl.u32 %v2731, 7
  %v2733 = vsub.s32 %v2730, %v2732
  %v2734 = vrot.slane %v2720, %v2733
  %v2735 = vcombine.low %v2711, %v2727
  %v2736 = vcombine.high %v2711, %v2727
  %v2738 = vunpack.c.l.s4 1934713408
  %v2739 = vunpack.c.0.s8 %v2738
  %v2740 = vlaneseq
  %v2741 = vshrl.u32 %v2740, 7
  %v2742 = vsub.s32 %v2739, %v2741
  %v2743 = vrot.slane %v2735, %v2742
  %v2745 = vunpack.c.l.s4 1934713408
  %v2746 = vunpack.c.0.s8 %v2745
  %v2747 = vlaneseq
  %v2748 = vshrl.u32 %v2747, 7
  %v2749 = vsub.s32 %v2746, %v2748
  %v2750 = vrot.slane %v2736, %v2749
  %v2751 = vcombine.low %v2718, %v2734
  %v2752 = vcombine.high %v2718, %v2734
  %v2754 = vunpack.c.l.s4 1934713408
  %v2755 = vunpack.c.0.s8 %v2754
  %v2756 = vlaneseq
  %v2757 = vshrl.u32 %v2756, 7
  %v2758 = vsub.s32 %v2755, %v2757
  %v2759 = vrot.slane %v2751, %v2758
  %v2761 = vunpack.c.l.s4 1934713408
  %v2762 = vunpack.c.0.s8 %v2761
  %v2763 = vlaneseq
  %v2764 = vshrl.u32 %v2763, 7
  %v2765 = vsub.s32 %v2762, %v2764
  %v2766 = vrot.slane %v2752, %v2765
  %v2767 = vcombine.high %v2743, 0.0
  %v2768 = vcombine.high %v2750, 0.0
  %v2769 = vcombine.high %v2759, 0.0
  %v2770 = vcombine.high %v2766, 0.0
  %v2771 = vcombine.low %v1719, %v1721
  %v2772 = vcombine.high %v1719, %v1721
  %v2774 = vunpack.c.l.s4 1983009808
  %v2775 = vunpack.c.0.s8 %v2774
  %v2776 = vlaneseq
  %v2777 = vshrl.u32 %v2776, 7
  %v2778 = vsub.s32 %v2775, %v2777
  %v2779 = vrot.slane %v2771, %v2778
  %v2781 = vunpack.c.l.s4 1983009808
  %v2782 = vunpack.c.0.s8 %v2781
  %v2783 = vlaneseq
  %v2784 = vshrl.u32 %v2783, 7
  %v2785 = vsub.s32 %v2782, %v2784
  %v2786 = vrot.slane %v2772, %v2785
  %v2787 = vcombine.low %v1720, %v1722
  %v2788 = vcombine.high %v1720, %v1722
  %v2790 = vunpack.c.l.s4 1983009808
  %v2791 = vunpack.c.0.s8 %v2790
  %v2792 = vlaneseq
  %v2793 = vshrl.u32 %v2792, 7
  %v2794 = vsub.s32 %v2791, %v2793
  %v2795 = vrot.slane %v2787, %v2794
  %v2797 = vunpack.c.l.s4 1983009808
  %v2798 = vunpack.c.0.s8 %v2797
  %v2799 = vlaneseq
  %v2800 = vshrl.u32 %v2799, 7
  %v2801 = vsub.s32 %v2798, %v2800
  %v2802 = vrot.slane %v2788, %v2801
  %v2803 = vcombine.low %v2779, %v2795
  %v2804 = vcombine.high %v2779, %v2795
  %v2806 = vunpack.c.l.s4 1934713408
  %v2807 = vunpack.c.0.s8 %v2806
  %v2808 = vlaneseq
  %v2809 = vshrl.u32 %v2808, 7
  %v2810 = vsub.s32 %v2807, %v2809
  %v2811 = vrot.slane %v2803, %v2810
  %v2813 = vunpack.c.l.s4 1934713408
  %v2814 = vunpack.c.0.s8 %v2813
  %v2815 = vlaneseq
  %v2816 = vshrl.u32 %v2815, 7
  %v2817 = vsub.s32 %v2814, %v2816
  %v2818 = vrot.slane %v2804, %v2817
  %v2819 = vcombine.low %v2786, %v2802
  %v2820 = vcombine.high %v2786, %v2802
  %v2822 = vunpack.c.l.s4 1934713408
  %v2823 = vunpack.c.0.s8 %v2822
  %v2824 = vlaneseq
  %v2825 = vshrl.u32 %v2824, 7
  %v2826 = vsub.s32 %v2823, %v2825
  %v2827 = vrot.slane %v2819, %v2826
  %v2829 = vunpack.c.l.s4 1934713408
  %v2830 = vunpack.c.0.s8 %v2829
  %v2831 = vlaneseq
  %v2832 = vshrl.u32 %v2831, 7
  %v2833 = vsub.s32 %v2830, %v2832
  %v2834 = vrot.slane %v2820, %v2833
  %v2835 = vcombine.high %v2811, 0.0
  %v2836 = vcombine.high %v2818, 0.0
  %v2837 = vcombine.high %v2827, 0.0
  %v2838 = vcombine.high %v2834, 0.0
  %v2839 = vcombine.low %v2743, %v2750
  %v2841 = vunpack.c.l.s4 1983009808
  %v2842 = vunpack.c.0.s8 %v2841
  %v2843 = vlaneseq
  %v2844 = vshrl.u32 %v2843, 7
  %v2845 = vsub.s32 %v2842, %v2844
  %v2846 = vrot.slane %v2839, %v2845
  %v2847 = vcombine.low %v2767, %v2768
  %v2849 = vunpack.c.l.s4 1983009808
  %v2850 = vunpack.c.0.s8 %v2849
  %v2851 = vlaneseq
  %v2852 = vshrl.u32 %v2851, 7
  %v2853 = vsub.s32 %v2850, %v2852
  %v2854 = vrot.slane %v2847, %v2853
  %v2855 = vcombine.low %v2759, %v2766
  %v2857 = vunpack.c.l.s4 1983009808
  %v2858 = vunpack.c.0.s8 %v2857
  %v2859 = vlaneseq
  %v2860 = vshrl.u32 %v2859, 7
  %v2861 = vsub.s32 %v2858, %v2860
  %v2862 = vrot.slane %v2855, %v2861
  %v2863 = vcombine.low %v2769, %v2770
  %v2865 = vunpack.c.l.s4 1983009808
  %v2866 = vunpack.c.0.s8 %v2865
  %v2867 = vlaneseq
  %v2868 = vshrl.u32 %v2867, 7
  %v2869 = vsub.s32 %v2866, %v2868
  %v2870 = vrot.slane %v2863, %v2869
  %v2871 = vcombine.low %v2846, %v2854
  %v2872 = vcombine.high %v2846, %v2854
  %v2874 = vunpack.c.l.s4 1934713408
  %v2875 = vunpack.c.0.s8 %v2874
  %v2876 = vlaneseq
  %v2877 = vshrl.u32 %v2876, 7
  %v2878 = vsub.s32 %v2875, %v2877
  %v2879 = vrot.slane %v2871, %v2878
  %v2881 = vunpack.c.l.s4 1934713408
  %v2882 = vunpack.c.0.s8 %v2881
  %v2883 = vlaneseq
  %v2884 = vshrl.u32 %v2883, 7
  %v2885 = vsub.s32 %v2882, %v2884
  %v2886 = vrot.slane %v2872, %v2885
  %v2887 = vcombine.low %v2862, %v2870
  %v2888 = vcombine.high %v2862, %v2870
  %v2890 = vunpack.c.l.s4 1934713408
  %v2891 = vunpack.c.0.s8 %v2890
  %v2892 = vlaneseq
  %v2893 = vshrl.u32 %v2892, 7
  %v2894 = vsub.s32 %v2891, %v2893
  %v2895 = vrot.slane %v2887, %v2894
  %v2897 = vunpack.c.l.s4 1934713408
  %v2898 = vunpack.c.0.s8 %v2897
  %v2899 = vlaneseq
  %v2900 = vshrl.u32 %v2899, 7
  %v2901 = vsub.s32 %v2898, %v2900
  %v2902 = vrot.slane %v2888, %v2901
  %v2903 = vcombine.low %v2879, %v2895
  %v2904 = vcombine.high %v2879, %v2895
  %v2905 = vcombine.low %v2886, %v2902
  %v2906 = vcombine.high %v2886, %v2902
  %v2907 = vcombine.low %v2811, %v2818
  %v2909 = vunpack.c.l.s4 1983009808
  %v2910 = vunpack.c.0.s8 %v2909
  %v2911 = vlaneseq
  %v2912 = vshrl.u32 %v2911, 7
  %v2913 = vsub.s32 %v2910, %v2912
  %v2914 = vrot.slane %v2907, %v2913
  %v2915 = vcombine.low %v2835, %v2836
  %v2917 = vunpack.c.l.s4 1983009808
  %v2918 = vunpack.c.0.s8 %v2917
  %v2919 = vlaneseq
  %v2920 = vshrl.u32 %v2919, 7
  %v2921 = vsub.s32 %v2918, %v2920
  %v2922 = vrot.slane %v2915, %v2921
  %v2923 = vcombine.low %v2827, %v2834
  %v2925 = vunpack.c.l.s4 1983009808
  %v2926 = vunpack.c.0.s8 %v2925
  %v2927 = vlaneseq
  %v2928 = vshrl.u32 %v2927, 7
  %v2929 = vsub.s32 %v2926, %v2928
  %v2930 = vrot.slane %v2923, %v2929
  %v2931 = vcombine.low %v2837, %v2838
  %v2933 = vunpack.c.l.s4 1983009808
  %v2934 = vunpack.c.0.s8 %v2933
  %v2935 = vlaneseq
  %v2936 = vshrl.u32 %v2935, 7
  %v2937 = vsub.s32 %v2934, %v2936
  %v2938 = vrot.slane %v2931, %v2937
  %v2939 = vcombine.low %v2914, %v2922
  %v2940 = vcombine.high %v2914, %v2922
  %v2942 = vunpack.c.l.s4 1934713408
  %v2943 = vunpack.c.0.s8 %v2942
  %v2944 = vlaneseq
  %v2945 = vshrl.u32 %v2944, 7
  %v2946 = vsub.s32 %v2943, %v2945
  %v2947 = vrot.slane %v2939, %v2946
  %v2949 = vunpack.c.l.s4 1934713408
  %v2950 = vunpack.c.0.s8 %v2949
  %v2951 = vlaneseq
  %v2952 = vshrl.u32 %v2951, 7
  %v2953 = vsub.s32 %v2950, %v2952
  %v2954 = vrot.slane %v2940, %v2953
  %v2955 = vcombine.low %v2930, %v2938
  %v2956 = vcombine.high %v2930, %v2938
  %v2958 = vunpack.c.l.s4 1934713408
  %v2959 = vunpack.c.0.s8 %v2958
  %v2960 = vlaneseq
  %v2961 = vshrl.u32 %v2960, 7
  %v2962 = vsub.s32 %v2959, %v2961
  %v2963 = vrot.slane %v2955, %v2962
  %v2965 = vunpack.c.l.s4 1934713408
  %v2966 = vunpack.c.0.s8 %v2965
  %v2967 = vlaneseq
  %v2968 = vshrl.u32 %v2967, 7
  %v2969 = vsub.s32 %v2966, %v2968
  %v2970 = vrot.slane %v2956, %v2969
  %v2971 = vcombine.low %v2947, %v2963
  %v2972 = vcombine.high %v2947, %v2963
  %v2973 = vcombine.low %v2954, %v2970
  %v2974 = vcombine.high %v2954, %v2970
  %2977 = vrot.lane.b32.xlu0 %v2904, 8
  %v2978 = vpop.permute.xlu0 %2977
  %2979 = vrot.lane.b32.xlu0 %v2972, 8
  %v2980 = vpop.permute.xlu0 %2979
  %2985 = vrot.lane.b32.xlu0 %v2905, 16
  %v2986 = vpop.permute.xlu0 %2985
  %2987 = vrot.lane.b32.xlu0 %v2973, 16
  %v2988 = vpop.permute.xlu0 %2987
  %2993 = vrot.lane.b32.xlu0 %v2906, 24
  %v2994 = vpop.permute.xlu0 %2993
  %2995 = vrot.lane.b32.xlu0 %v2974, 24
  %v2996 = vpop.permute.xlu0 %2995
  %v2999 = vsel %vm1002, %v2903, %v2978
  %v3000 = vsel %vm1002, %v2971, %v2980
  %v3001 = vsel %vm2605, %v2999, %v2986
  %v3002 = vsel %vm2605, %v3000, %v2988
  %v3003 = vsel %vm2608, %v3001, %v2994
  %v3004 = vsel %vm2608, %v3002, %v2996
  %3005 = vrot.lane.b32.xlu0 %v2609, 96
  %v3006 = vpop.permute.xlu0 %3005
  %3007 = vrot.lane.b32.xlu0 %v2610, 96
  %v3008 = vpop.permute.xlu0 %3007
  %3013 = vrot.lane.b32.xlu0 %v3003, 32
  %v3014 = vpop.permute.xlu0 %3013
  %3015 = vrot.lane.b32.xlu0 %v3004, 32
  %v3016 = vpop.permute.xlu0 %3015
  %vm3019 = vcmask 785408
  %v3020 = vsel %vm3019, %v110, %v3006
  %v3021 = vsel %vm3019, %v115, %v3008
  %v3022 = vsel %vm36, %v2695, %v3014
  %v3023 = vsel %vm36, %v2700, %v3016
  %3024 = vst [vmem:[%s6] sm:$0xff] %v3020
  %vm3025 = vcmask 523264
  %3026 = vst.msk [vmem:[%s6 + $0x8] sm:$0xff] %vm3025, %v3022
  %3027 = vst [vmem:[%s6 + $0x10] sm:$0xff] %v3021
  %3028 = vst.msk [vmem:[%s6 + $0x18] sm:$0xff] %vm3025, %v3023
  // Predicated region
  $region26: #{mixed_sparse_full_attention.1} parent=0 // pred_check
    _
  $region27: #{mixed_sparse_full_attention.1} parent=0 // pred_check_branch
    %3030 = sbr.rel (0) target = $region29
  $region28: #{mixed_sparse_full_attention.1} parent=0 // pred_region
    _
  $region29: #{mixed_sparse_full_attention.1} parent=0 // pred_fallthru
    _
  // Predicated region
  $region30: #{mixed_sparse_full_attention.1} parent=0 // pred_check
    _
  $region31: #{mixed_sparse_full_attention.1} parent=0 // pred_check_branch
    %3032 = sbr.rel (0) target = $region33
  $region32: #{mixed_sparse_full_attention.1} parent=0 // pred_region
    _
  $region33: #{mixed_sparse_full_attention.1} parent=0 // pred_fallthru
    _

</llo_original>
